<compile_context>
chip_gen: v7x
topology: tpu7x:2x2x1
jax: 0.10.0
libtpu: 0.0.40
codegen_flags: <defaults>
</compile_context>

<pallas_src>
from functools import partial

import jax
import jax.numpy as jnp
from jax.experimental import pallas as pl
from jax.experimental.pallas import tpu as pltpu


# ------------------------------ Pallas kernel --------------------------------
def _gather_add_kernel(idx_ref, x_ref, up_ref, o_ref):
    """out_tile = up_tile + x[unq_inv[tile rows], :]  (vectorized one-hot gather).

    idx_ref : VMEM (TILE_M, 1) int32   per-tile gather indices
    x_ref   : VMEM (N, C)              full source features (resident)
    up_ref  : VMEM (TILE_M, C)         streamed tile of up_x.features
    o_ref   : VMEM (TILE_M, C)         streamed output tile
    """
    n = x_ref.shape[0]
    tile_m = up_ref.shape[0]

    # Clamp indices: guards both bogus user indices and the garbage values
    # loaded for the masked ragged tail of the last tile.
    idx = jnp.clip(idx_ref[...], 0, n - 1)                        # (TILE_M, 1)

    # One-hot MXU gather: onehot[r, j] = (idx[r] == j); gathered = onehot @ x.
    # Exact (each row selects exactly one source row) and runs on the
    # otherwise-idle MXU, keeping the kernel HBM-bound.
    row_ids = jax.lax.broadcasted_iota(jnp.int32, (tile_m, n), 1)  # (TILE_M, N)
    onehot = (idx == row_ids).astype(x_ref.dtype)                  # (TILE_M, N)
    gathered = jnp.dot(onehot, x_ref[...],
                       preferred_element_type=jnp.float32)         # (TILE_M, C)

    o_ref[...] = (up_ref[...].astype(jnp.float32) + gathered).astype(o_ref.dtype)


# ------------------------------ host wrapper ----------------------------------
@partial(jax.jit, static_argnames=("tile_m",))
def patch_expanding3d_gather_add(x_features, up_features, unq_inv, *, tile_m=512):
    """Fused `up_features + x_features[unq_inv]` (row gather + add), one HBM pass."""
    n, c = x_features.shape
    m, c2 = up_features.shape
    assert c == c2, "channel mismatch between x.features and up_x.features"

    # Never use a tile taller than the (sublane-rounded) row count.
    tile_m = max(8, min(tile_m, ((m + 7) // 8) * 8))

    idx2d = unq_inv.astype(jnp.int32).reshape(m, 1)

    return pl.pallas_call(
        _gather_add_kernel,
        out_shape=jax.ShapeDtypeStruct((m, c), up_features.dtype),
        grid=(pl.cdiv(m, tile_m),),
        in_specs=[
            # per-tile gather indices, streamed as a thin int32 VMEM block
            pl.BlockSpec((tile_m, 1), lambda i: (i, 0)),
            # x.features: full array resident in VMEM (constant index_map)
            pl.BlockSpec((n, c), lambda i: (0, 0)),
            # up_x.features: streamed lane-dense tiles
            pl.BlockSpec((tile_m, c), lambda i: (i, 0)),
        ],
        out_specs=pl.BlockSpec((tile_m, c), lambda i: (i, 0)),
        compiler_params=pltpu.CompilerParams(
            dimension_semantics=("parallel",),        # split tiles across TCs
            vmem_limit_bytes=32 * 1024 * 1024,        # explicit budget (v5e default is 16 MiB)
        ),
    )(idx2d, x_features, up_features)


# --------------------------- module-level plumbing ----------------------------
class SparseTensorStub:
    """Minimal stand-in for spconv.SparseConvTensor (features + replace_feature)."""

    def __init__(self, features):
        self.features = features

    def replace_feature(self, new_features):
        return SparseTensorStub(new_features)


class PatchExpanding3D:
    def __init__(self, dim):
        self.dim = dim

    def forward(self, x, up_x, unq_inv):
        fused = patch_expanding3d_gather_add(x.features, up_x.features, unq_inv)
        return up_x.replace_feature(fused)

    __call__ = forward


# ----------------------------------- main --------------------------------------
if __name__ == "__main__":
    key = jax.random.PRNGKey(0)
    k_x, k_up, k_idx = jax.random.split(key, 3)

    DIM = 128         # feature channels (lane-dense: multiple of 128)
    N_UNIQUE = 384    # rows of x.features (coarse voxels)
    M_UP = 1000       # rows of up_x.features (fine voxels); exercises ragged last tile

    x_feat = jax.random.normal(k_x, (N_UNIQUE, DIM), jnp.float32)
    up_feat = jax.random.normal(k_up, (M_UP, DIM), jnp.float32)
    unq_inv = jax.random.randint(k_idx, (M_UP,), 0, N_UNIQUE, dtype=jnp.int32)

    x = SparseTensorStub(x_feat)
    up_x = SparseTensorStub(up_feat)

    module = PatchExpanding3D(DIM)
    out = module(x, up_x, unq_inv)
    out_feat = jax.block_until_ready(out.features)

    # reference: out[i] = up[i] + x[unq_inv[i]]
    ref = up_feat + x_feat[unq_inv]
    assert out_feat.shape == (M_UP, DIM)
    assert bool(jnp.all(jnp.isfinite(out_feat)))
    assert bool(jnp.allclose(out_feat, ref, atol=1e-6, rtol=1e-6))
    print("KERNEL_OK")
</pallas_src>

<mosaic_0001>
module attributes {stable_mosaic.version = 11 : i64} {
  func.func @_gather_add_kernel(%arg0: i32, %arg1: memref<512x1xi32, #tpu.memory_space<vmem>>, %arg2: memref<384x128xf32, #tpu.memory_space<vmem>>, %arg3: memref<512x128xf32, #tpu.memory_space<vmem>>, %arg4: memref<512x128xf32, #tpu.memory_space<vmem>>) attributes {dimension_semantics = [#tpu.dimension_semantics<parallel>], iteration_bounds = array<i64: 2>, scalar_prefetch = 0 : i64, scratch_operands = 0 : i64, tpu.core_type = #tpu.core_type<tc>, window_params = [{transform_indices = @transform_0, window_bounds = array<i64: 512, 1>}, {pipeline_mode = #tpu.pipeline_mode<synchronous>, transform_indices = @transform_1, window_bounds = array<i64: 384, 128>}, {transform_indices = @transform_2, window_bounds = array<i64: 512, 128>}, {transform_indices = @transform_3, window_bounds = array<i64: 512, 128>}]} {
    %c0 = arith.constant 0 : index
    %c0_0 = arith.constant 0 : index
    %0 = vector.load %arg1[%c0, %c0_0] : memref<512x1xi32, #tpu.memory_space<vmem>>, vector<512x1xi32>
    %c0_i32 = arith.constant 0 : i32
    %c383_i32 = arith.constant 383 : i32
    %1 = vector.broadcast %c0_i32 : i32 to vector<512x1xi32>
    %2 = arith.maxsi %1, %0 : vector<512x1xi32>
    %3 = vector.broadcast %c383_i32 : i32 to vector<512x1xi32>
    %4 = arith.minsi %3, %2 : vector<512x1xi32>
    %5 = tpu.iota {dimensions = array<i32: 1>} : vector<512x384xi32>
    %6 = vector.broadcast %4 : vector<512x1xi32> to vector<512x384xi32>
    %7 = arith.cmpi eq, %6, %5 : vector<512x384xi32>
    %8 = arith.extui %7 : vector<512x384xi1> to vector<512x384xi32>
    %9 = arith.sitofp %8 : vector<512x384xi32> to vector<512x384xf32>
    %c0_1 = arith.constant 0 : index
    %c0_2 = arith.constant 0 : index
    %10 = vector.load %arg2[%c0_1, %c0_2] : memref<384x128xf32, #tpu.memory_space<vmem>>, vector<384x128xf32>
    %cst = arith.constant dense<0.000000e+00> : vector<512x128xf32>
    %11 = tpu.matmul %9, %10, %cst {dimension_numbers = #tpu.dot_dimension_numbers<[1], [0], [0], [1], [0, 0, 1, 1], [], []>} : vector<512x384xf32>, vector<384x128xf32>, vector<512x128xf32> -> vector<512x128xf32>
    %c0_3 = arith.constant 0 : index
    %c0_4 = arith.constant 0 : index
    %12 = vector.load %arg3[%c0_3, %c0_4] : memref<512x128xf32, #tpu.memory_space<vmem>>, vector<512x128xf32>
    %13 = arith.addf %12, %11 : vector<512x128xf32>
    %c0_5 = arith.constant 0 : index
    %c0_6 = arith.constant 0 : index
    %14 = vector.load %arg4[%c0_5, %c0_6] : memref<512x128xf32, #tpu.memory_space<vmem>>, vector<512x128xf32>
    tpu.vector_store %arg4[%c0_5, %c0_6], %13 {strides = array<i32>} : memref<512x128xf32, #tpu.memory_space<vmem>>, vector<512x128xf32>,
    return
  }
  func.func @transform_0(%arg0: i32) -> (i32, i32) {
    %c0_i32 = arith.constant 0 : i32
    %c0_i32_0 = arith.constant 0 : i32
    return %arg0, %c0_i32 : i32, i32
  }
  func.func @transform_1(%arg0: i32) -> (i32, i32) {
    %c0_i32 = arith.constant 0 : i32
    %c0_i32_0 = arith.constant 0 : i32
    %c0_i32_1 = arith.constant 0 : i32
    return %c0_i32, %c0_i32_0 : i32, i32
  }
  func.func @transform_2(%arg0: i32) -> (i32, i32) {
    %c0_i32 = arith.constant 0 : i32
    %c0_i32_0 = arith.constant 0 : i32
    return %arg0, %c0_i32 : i32, i32
  }
  func.func @transform_3(%arg0: i32) -> (i32, i32) {
    %c0_i32 = arith.constant 0 : i32
    %c0_i32_0 = arith.constant 0 : i32
    return %arg0, %c0_i32 : i32, i32
  }
}

</mosaic_0001>

<llo_original>
// kernel: patch_expanding3d_gather_add.1
$region0: #{patch_expanding3d_gather_add.1}
  #allocation0 [shape = 'u32[]', space=smem, size = 0x4, offset = 0x4, fixed_abs, tag = 'smem constant byte address 0x4 - core index']
  #allocation1 [shape = 'u32[144,128]{1,0:T(1,128)}', space=vmem, size = 0x12000, scoped, tag = 'internal scratch']
  %s0 = inlined_call_operand.vmem [shape: s32[1000,1], index: 0, kind: input, shape index: {}]
  %s1 = inlined_call_operand.hbm [shape: f32[384,128], index: 1, kind: input, shape index: {}]
  %s2 = inlined_call_operand.vmem [shape: f32[1000,128], index: 2, kind: input, shape index: {}]
  %s3 = inlined_call_operand.hbm [shape: f32[1000,128], index: 3, kind: output, shape index: {}]
  %s4 = sld [smem:[#allocation0]]
  $region49: #{patch_expanding3d_gather_add.1} parent=0
    _
  %s6 = ssub.s32 1, %s4
  %s7 = scalar_select 0, %s6, %s4
  $region1: #{patch_expanding3d_gather_add.1} parent=0
    #allocation2 [shape = 'u8[196608]{0}', space=vmem, size = 0x30000, scoped, tag = 'input window, operand 1, single buffered']
    #allocation3 [shape = 's32[2]{0}', space=sflag, size = 0x8, scoped, tag = 'scoped memory for patch_expanding3d_gather_add.1']
    #allocation4 [shape = 's32[2]{0}', space=sflag, size = 0x8, scoped, tag = 'scoped memory for patch_expanding3d_gather_add.1']
    #allocation5 [shape = 'u8[524288]{0}', space=vmem, size = 0x80000, scoped, tag = 'output window, operand 0']
    %8 = vsyncpa [#allocation3], 0
    %9 = vsyncpa [#allocation4], 0
    %s10 = scalar_lea.sflag [#allocation4], 1
    %11 = vsyncpa %s10, 0
    loop: start=0, step=1, limit=4
    $region2: #{patch_expanding3d_gather_add.1} parent=1 // loop_pre_header
      _
    $region3: #{patch_expanding3d_gather_add.1} parent=1 // loop_header
      %s13 = sphi 0, %s17
      %p14 = scmp.ge.s32.totalorder %s13, 4
      %s23 = sphi 0, %s25
      %s26 = sphi 0, %s23
      %s27 = sphi 0, %s26
      %s43 = sphi 0, %s27
      %s47 = sphi 0, %s47
      %s49 = sphi 0, %s47
      %s50 = sphi 0, %s49
      %s64 = sphi 0, %s50
      %s70 = sphi 0, %s72
      %s73 = sphi 0, %s70
      %s74 = sphi 0, %s73
      %s90 = sphi 0, %s74
      %s96 = sphi 0, %s98
      %s99 = sphi 0, %s96
      %s100 = sphi 0, %s99
      %s116 = sphi 0, %s100
    $region4: #{patch_expanding3d_gather_add.1} parent=1 // loop_header_branch
      %16 = sbr.rel (%p14) target = $region8
    $region5: #{patch_expanding3d_gather_add.1} parent=1 // loop_body
      %s18 = ssub.s32 %s13, 1
      %s19 = ssub.s32 %s13, 2
      %s20 = sadd.s32 %s13, 1
      %s21 = ssub.s32 %s13, %s20
      %p22 = scmp.eq.s32.totalorder %s21, 0
      %s24 = sadd.s32 %s23, 1
      %s25 = scalar_select %p22, %s23, %s24
      %p28 = pneg %p22
      %p29 = scmp.eq.s32.totalorder %s13, 1
      %p30 = por %p28, %p29
      %p31 = scmp.ne.s32.totalorder %s23, %s26
      %p32 = scmp.eq.s32.totalorder %s13, 0
      %p33 = por %p31, %p32
      %p34 = scmp.ne.s32.totalorder %s23, %s26
      %p35 = scmp.eq.s32.totalorder %s18, 1
      %p36 = por %p34, %p35
      %p37 = scmp.ne.s32.totalorder %s26, %s27
      %p38 = scmp.eq.s32.totalorder %s18, 0
      %p39 = por %p37, %p38
      %p40 = scmp.ne.s32.totalorder %s26, %s27
      %p41 = scmp.eq.s32.totalorder %s19, 1
      %p42 = por %p40, %p41
      %p44 = scmp.ne.s32.totalorder %s27, %s43
      %p45 = scmp.eq.s32.totalorder %s19, 0
      %p46 = por %p44, %p45
      %s48 = sadd.s32 %s47, 1
      %p51 = scmp.eq.s32.totalorder %s13, 1
      %p52 = scmp.ne.s32.totalorder %s47, %s49
      %p53 = scmp.eq.s32.totalorder %s13, 0
      %p54 = por %p52, %p53
      %p55 = scmp.ne.s32.totalorder %s47, %s49
      %p56 = scmp.eq.s32.totalorder %s18, 1
      %p57 = por %p55, %p56
      %p58 = scmp.ne.s32.totalorder %s49, %s50
      %p59 = scmp.eq.s32.totalorder %s18, 0
      %p60 = por %p58, %p59
      %p61 = scmp.ne.s32.totalorder %s49, %s50
      %p62 = scmp.eq.s32.totalorder %s19, 1
      %p63 = por %p61, %p62
      %p65 = scmp.ne.s32.totalorder %s50, %s64
      %p66 = scmp.eq.s32.totalorder %s19, 0
      %p67 = por %p65, %p66
      %s68 = ssub.s32 %s13, %s20
      %p69 = scmp.eq.s32.totalorder %s68, 0
      %s71 = sadd.s32 %s70, 1
      %s72 = scalar_select %p69, %s70, %s71
      %p75 = pneg %p69
      %p76 = scmp.eq.s32.totalorder %s13, 1
      %p77 = por %p75, %p76
      %p78 = scmp.ne.s32.totalorder %s70, %s73
      %p79 = scmp.eq.s32.totalorder %s13, 0
      %p80 = por %p78, %p79
      %p81 = scmp.ne.s32.totalorder %s70, %s73
      %p82 = scmp.eq.s32.totalorder %s18, 1
      %p83 = por %p81, %p82
      %p84 = scmp.ne.s32.totalorder %s73, %s74
      %p85 = scmp.eq.s32.totalorder %s18, 0
      %p86 = por %p84, %p85
      %p87 = scmp.ne.s32.totalorder %s73, %s74
      %p88 = scmp.eq.s32.totalorder %s19, 1
      %p89 = por %p87, %p88
      %p91 = scmp.ne.s32.totalorder %s74, %s90
      %p92 = scmp.eq.s32.totalorder %s19, 0
      %p93 = por %p91, %p92
      %s94 = ssub.s32 %s13, %s20
      %p95 = scmp.eq.s32.totalorder %s94, 0
      %s97 = sadd.s32 %s96, 1
      %s98 = scalar_select %p95, %s96, %s97
      %p101 = pneg %p95
      %p102 = scmp.eq.s32.totalorder %s13, 1
      %p103 = por %p101, %p102
      %p104 = scmp.ne.s32.totalorder %s96, %s99
      %p105 = scmp.eq.s32.totalorder %s13, 0
      %p106 = por %p104, %p105
      %p107 = scmp.ne.s32.totalorder %s96, %s99
      %p108 = scmp.eq.s32.totalorder %s18, 1
      %p109 = por %p107, %p108
      %p110 = scmp.ne.s32.totalorder %s99, %s100
      %p111 = scmp.eq.s32.totalorder %s18, 0
      %p112 = por %p110, %p111
      %p113 = scmp.ne.s32.totalorder %s99, %s100
      %p114 = scmp.eq.s32.totalorder %s19, 1
      %p115 = por %p113, %p114
      %p117 = scmp.ne.s32.totalorder %s100, %s116
      %p118 = scmp.eq.s32.totalorder %s19, 0
      %p119 = por %p117, %p118
      %p120 = scmp.le.s32.totalorder 1, %s13
      %p121 = scmp.lt.s32.totalorder %s13, 3
      %p122 = pnand %p120, %p121
      %p123 = pneg %p122
      // Predicated region
      $region9: #{patch_expanding3d_gather_add.1} parent=5 // pred_check
        _
      $region10: #{patch_expanding3d_gather_add.1} parent=5 // pred_check_branch
        %125 = sbr.rel (%p122) target = $region12
      $region11: #{patch_expanding3d_gather_add.1} parent=5 // pred_region
        %s126 = ssub.s32 %s13, 1
        // Predicated region
        $region13: #{patch_expanding3d_gather_add.1} parent=11 // pred_check
          %p127 = pneg %p60
        $region14: #{patch_expanding3d_gather_add.1} parent=11 // pred_check_branch
          %129 = sbr.rel (%p127) target = $region16
        $region15: #{patch_expanding3d_gather_add.1} parent=11 // pred_region
          %s131 = ssub.s32 6144, 6144
          %132 = vsyncadd [#allocation3], %s131
          %s133 = sshll.u32 [#allocation2], 4
          %s134 = int_to_ptr.vmem [resolvable:$true] %s133
          %139 = dma.hbm_to_vmem [thread:$0]  %s1, 6144, %s134, [#allocation3], 128, 128, 8
        $region16: #{patch_expanding3d_gather_add.1} parent=11 // pred_fallthru
          _
      $region12: #{patch_expanding3d_gather_add.1} parent=5 // pred_fallthru
        _
      %p140 = scmp.lt.s32.totalorder %s13, 2
      // Predicated region
      $region17: #{patch_expanding3d_gather_add.1} parent=5 // pred_check
        %p141 = pneg %p140
      $region18: #{patch_expanding3d_gather_add.1} parent=5 // pred_check_branch
        %143 = sbr.rel (%p141) target = $region20
      $region19: #{patch_expanding3d_gather_add.1} parent=5 // pred_region
        // Predicated region
        $region21: #{patch_expanding3d_gather_add.1} parent=19 // pred_check
          %p144 = pneg %p33
        $region22: #{patch_expanding3d_gather_add.1} parent=19 // pred_check_branch
          %146 = sbr.rel (%p144) target = $region24
        $region23: #{patch_expanding3d_gather_add.1} parent=19 // pred_region
          %s147 = smul.u32 64, %s13
          %s148 = ssub.s32 125, %s147
          %p149 = scmp.lt.s32.totalorder %s148, 64
          %s150 = scalar_select %p149, %s148, 64
          %s151 = smul.u32 128, %s150
          %p152 = scmp.lt.s32.totalorder %s147, 124
          %s153 = scalar_select %p152, %s147, 124
          %s154 = smul.addr %s153, 8
          %s155 = scalar_lea.vmem %s0, %s154
          %s156 = smul.u32 64, %s13
          %s157 = ssub.s32 125, %s156
          %p158 = scmp.lt.s32.totalorder %s157, 64
          %s159 = scalar_select %p158, %s157, 64
          %s160 = smul.u32 128, %s159
        $region24: #{patch_expanding3d_gather_add.1} parent=19 // pred_fallthru
          _
        // Predicated region
        $region25: #{patch_expanding3d_gather_add.1} parent=19 // pred_check
          %p161 = pneg %p80
        $region26: #{patch_expanding3d_gather_add.1} parent=19 // pred_check_branch
          %163 = sbr.rel (%p161) target = $region28
        $region27: #{patch_expanding3d_gather_add.1} parent=19 // pred_region
          %s164 = smul.u32 64, %s13
          %s165 = ssub.s32 125, %s164
          %p166 = scmp.lt.s32.totalorder %s165, 64
          %s167 = scalar_select %p166, %s165, 64
          %s168 = smul.u32 128, %s167
          %p169 = scmp.lt.s32.totalorder %s164, 124
          %s170 = scalar_select %p169, %s164, 124
          %s171 = smul.addr %s170, 8
          %s172 = scalar_lea.vmem %s2, %s171
          %s173 = smul.u32 64, %s13
          %s174 = ssub.s32 125, %s173
          %p175 = scmp.lt.s32.totalorder %s174, 64
          %s176 = scalar_select %p175, %s174, 64
          %s177 = smul.u32 128, %s176
        $region28: #{patch_expanding3d_gather_add.1} parent=19 // pred_fallthru
          _
      $region20: #{patch_expanding3d_gather_add.1} parent=5 // pred_fallthru
        _
      %p178 = scmp.le.s32.totalorder 1, %s13
      %p179 = scmp.lt.s32.totalorder %s13, 3
      %p180 = pnand %p178, %p179
      %p181 = pneg %p180
      // Predicated region
      $region29: #{patch_expanding3d_gather_add.1} parent=5 // pred_check
        _
      $region30: #{patch_expanding3d_gather_add.1} parent=5 // pred_check_branch
        %183 = sbr.rel (%p180) target = $region32
      $region31: #{patch_expanding3d_gather_add.1} parent=5 // pred_region
        %s184 = ssub.s32 %s13, 1
        // Predicated region
        $region33: #{patch_expanding3d_gather_add.1} parent=31 // pred_check
          %p185 = pneg %p60
        $region34: #{patch_expanding3d_gather_add.1} parent=31 // pred_check_branch
          %187 = sbr.rel (%p185) target = $region36
        $region35: #{patch_expanding3d_gather_add.1} parent=31 // pred_region
          %188 = dma.done [#allocation3], 6144
        $region36: #{patch_expanding3d_gather_add.1} parent=31 // pred_fallthru
          _
        %s189 = smul.u32 64, %s18
        %s190 = ssub.s32 125, %s189
        %p191 = scmp.lt.s32.totalorder %s190, 64
        %s192 = scalar_select %p191, %s190, 64
        %s193 = smul.u32 128, %s192
        %p194 = scmp.lt.s32.totalorder %s189, 124
        %s195 = scalar_select %p194, %s189, 124
        %s196 = smul.addr %s195, 8
        %s197 = scalar_lea.vmem %s0, %s196
        %p198 = pneg %p39
        %p199 = pneg %p36
        %p200 = pneg %p60
        %p201 = pneg %p57
        %s202 = smul.u32 64, %s18
        %s203 = ssub.s32 125, %s202
        %p204 = scmp.lt.s32.totalorder %s203, 64
        %s205 = scalar_select %p204, %s203, 64
        %s206 = smul.u32 128, %s205
        %p207 = scmp.lt.s32.totalorder %s202, 124
        %s208 = scalar_select %p207, %s202, 124
        %s209 = smul.addr %s208, 8
        %s210 = scalar_lea.vmem %s2, %s209
        %p211 = pneg %p86
        %p212 = pneg %p83
        %p213 = pneg %p112
        %p214 = pneg %p109
        %s215 = sand.u32 %s99, 1
        %s216 = scalar_lea.sflag [#allocation4], %s215
        %s217 = sand.u32 %s99, 1
        %s218 = smul.addr %s217, 512
        %s219 = scalar_lea.vmem [#allocation5], %s218
        %s220 = smul.u32 64, %s18
        %s221 = ssub.s32 125, %s220
        %p222 = scmp.lt.s32.totalorder %s221, 64
        %s223 = scalar_select %p222, %s221, 64
        %s224 = smul.u32 128, %s223
        %p225 = scmp.lt.s32.totalorder %s220, 124
        %s226 = scalar_select %p225, %s220, 124
        %s227 = smul.addr %s226, 8
        %s228 = scalar_lea.vmem %s0, %s227
        %s229 = smul.u32 64, %s18
        %s230 = ssub.s32 125, %s229
        %p231 = scmp.lt.s32.totalorder %s230, 64
        %s232 = scalar_select %p231, %s230, 64
        %s233 = smul.u32 128, %s232
        %s234 = smul.u32 64, %s18
        %s235 = ssub.s32 125, %s234
        %p236 = scmp.lt.s32.totalorder %s235, 64
        %s237 = scalar_select %p236, %s235, 64
        %s238 = smul.u32 128, %s237
        %p239 = scmp.lt.s32.totalorder %s234, 124
        %s240 = scalar_select %p239, %s234, 124
        %s241 = smul.addr %s240, 8
        %s242 = scalar_lea.vmem %s2, %s241
        %s243 = smul.u32 64, %s18
        %s244 = ssub.s32 125, %s243
        %p245 = scmp.lt.s32.totalorder %s244, 64
        %s246 = scalar_select %p245, %s244, 64
        %s247 = smul.u32 128, %s246
        %s248 = smul.u32 64, %s18
        %s249 = ssub.s32 125, %s248
        %p250 = scmp.lt.s32.totalorder %s249, 64
        %s251 = scalar_select %p250, %s249, 64
        %s252 = smul.u32 128, %s251
        %v253 = vld [vmem:[%s228] sm:$0xff]
        %v254 = vld [vmem:[%s228 + $0x8] sm:$0xff]
        %v255 = vld [vmem:[%s228 + $0x10] sm:$0xff]
        %v256 = vld [vmem:[%s228 + $0x18] sm:$0xff]
        %v257 = vld [vmem:[%s228 + $0x20] sm:$0xff]
        %v258 = vld [vmem:[%s228 + $0x28] sm:$0xff]
        %v259 = vld [vmem:[%s228 + $0x30] sm:$0xff]
        %v260 = vld [vmem:[%s228 + $0x38] sm:$0xff]
        %v261 = vld [vmem:[%s228 + $0x40] sm:$0xff]
        %v262 = vld [vmem:[%s228 + $0x48] sm:$0xff]
        %v263 = vld [vmem:[%s228 + $0x50] sm:$0xff]
        %v264 = vld [vmem:[%s228 + $0x58] sm:$0xff]
        %v265 = vld [vmem:[%s228 + $0x60] sm:$0xff]
        %v266 = vld [vmem:[%s228 + $0x68] sm:$0xff]
        %v267 = vld [vmem:[%s228 + $0x70] sm:$0xff]
        %v268 = vld [vmem:[%s228 + $0x78] sm:$0xff]
        %v269 = vld [vmem:[%s228 + $0x80] sm:$0xff]
        %v270 = vld [vmem:[%s228 + $0x88] sm:$0xff]
        %v271 = vld [vmem:[%s228 + $0x90] sm:$0xff]
        %v272 = vld [vmem:[%s228 + $0x98] sm:$0xff]
        %v273 = vld [vmem:[%s228 + $0xa0] sm:$0xff]
        %v274 = vld [vmem:[%s228 + $0xa8] sm:$0xff]
        %v275 = vld [vmem:[%s228 + $0xb0] sm:$0xff]
        %v276 = vld [vmem:[%s228 + $0xb8] sm:$0xff]
        %v277 = vld [vmem:[%s228 + $0xc0] sm:$0xff]
        %v278 = vld [vmem:[%s228 + $0xc8] sm:$0xff]
        %v279 = vld [vmem:[%s228 + $0xd0] sm:$0xff]
        %v280 = vld [vmem:[%s228 + $0xd8] sm:$0xff]
        %v281 = vld [vmem:[%s228 + $0xe0] sm:$0xff]
        %v282 = vld [vmem:[%s228 + $0xe8] sm:$0xff]
        %v283 = vld [vmem:[%s228 + $0xf0] sm:$0xff]
        %v284 = vld [vmem:[%s228 + $0xf8] sm:$0xff]
        %v285 = vld [vmem:[%s228 + $0x100] sm:$0xff]
        %v286 = vld [vmem:[%s228 + $0x108] sm:$0xff]
        %v287 = vld [vmem:[%s228 + $0x110] sm:$0xff]
        %v288 = vld [vmem:[%s228 + $0x118] sm:$0xff]
        %v289 = vld [vmem:[%s228 + $0x120] sm:$0xff]
        %v290 = vld [vmem:[%s228 + $0x128] sm:$0xff]
        %v291 = vld [vmem:[%s228 + $0x130] sm:$0xff]
        %v292 = vld [vmem:[%s228 + $0x138] sm:$0xff]
        %v293 = vld [vmem:[%s228 + $0x140] sm:$0xff]
        %v294 = vld [vmem:[%s228 + $0x148] sm:$0xff]
        %v295 = vld [vmem:[%s228 + $0x150] sm:$0xff]
        %v296 = vld [vmem:[%s228 + $0x158] sm:$0xff]
        %v297 = vld [vmem:[%s228 + $0x160] sm:$0xff]
        %v298 = vld [vmem:[%s228 + $0x168] sm:$0xff]
        %v299 = vld [vmem:[%s228 + $0x170] sm:$0xff]
        %v300 = vld [vmem:[%s228 + $0x178] sm:$0xff]
        %v301 = vld [vmem:[%s228 + $0x180] sm:$0xff]
        %v302 = vld [vmem:[%s228 + $0x188] sm:$0xff]
        %v303 = vld [vmem:[%s228 + $0x190] sm:$0xff]
        %v304 = vld [vmem:[%s228 + $0x198] sm:$0xff]
        %v305 = vld [vmem:[%s228 + $0x1a0] sm:$0xff]
        %v306 = vld [vmem:[%s228 + $0x1a8] sm:$0xff]
        %v307 = vld [vmem:[%s228 + $0x1b0] sm:$0xff]
        %v308 = vld [vmem:[%s228 + $0x1b8] sm:$0xff]
        %v309 = vld [vmem:[%s228 + $0x1c0] sm:$0xff]
        %v310 = vld [vmem:[%s228 + $0x1c8] sm:$0xff]
        %v311 = vld [vmem:[%s228 + $0x1d0] sm:$0xff]
        %v312 = vld [vmem:[%s228 + $0x1d8] sm:$0xff]
        %v313 = vld [vmem:[%s228 + $0x1e0] sm:$0xff]
        %v314 = vld [vmem:[%s228 + $0x1e8] sm:$0xff]
        %v315 = vld [vmem:[%s228 + $0x1f0] sm:$0xff]
        %v316 = vld [vmem:[%s228 + $0x1f8] sm:$0xff]
        %vm317 = vcmp.gt.s32.totalorder %v253, 0
        %v318 = vsel %vm317, %v253, 0
        %vm319 = vcmp.gt.s32.totalorder %v254, 0
        %v320 = vsel %vm319, %v254, 0
        %vm321 = vcmp.gt.s32.totalorder %v255, 0
        %v322 = vsel %vm321, %v255, 0
        %vm323 = vcmp.gt.s32.totalorder %v256, 0
        %v324 = vsel %vm323, %v256, 0
        %vm325 = vcmp.gt.s32.totalorder %v257, 0
        %v326 = vsel %vm325, %v257, 0
        %vm327 = vcmp.gt.s32.totalorder %v258, 0
        %v328 = vsel %vm327, %v258, 0
        %vm329 = vcmp.gt.s32.totalorder %v259, 0
        %v330 = vsel %vm329, %v259, 0
        %vm331 = vcmp.gt.s32.totalorder %v260, 0
        %v332 = vsel %vm331, %v260, 0
        %vm333 = vcmp.gt.s32.totalorder %v261, 0
        %v334 = vsel %vm333, %v261, 0
        %vm335 = vcmp.gt.s32.totalorder %v262, 0
        %v336 = vsel %vm335, %v262, 0
        %vm337 = vcmp.gt.s32.totalorder %v263, 0
        %v338 = vsel %vm337, %v263, 0
        %vm339 = vcmp.gt.s32.totalorder %v264, 0
        %v340 = vsel %vm339, %v264, 0
        %vm341 = vcmp.gt.s32.totalorder %v265, 0
        %v342 = vsel %vm341, %v265, 0
        %vm343 = vcmp.gt.s32.totalorder %v266, 0
        %v344 = vsel %vm343, %v266, 0
        %vm345 = vcmp.gt.s32.totalorder %v267, 0
        %v346 = vsel %vm345, %v267, 0
        %vm347 = vcmp.gt.s32.totalorder %v268, 0
        %v348 = vsel %vm347, %v268, 0
        %vm349 = vcmp.gt.s32.totalorder %v269, 0
        %v350 = vsel %vm349, %v269, 0
        %vm351 = vcmp.gt.s32.totalorder %v270, 0
        %v352 = vsel %vm351, %v270, 0
        %vm353 = vcmp.gt.s32.totalorder %v271, 0
        %v354 = vsel %vm353, %v271, 0
        %vm355 = vcmp.gt.s32.totalorder %v272, 0
        %v356 = vsel %vm355, %v272, 0
        %vm357 = vcmp.gt.s32.totalorder %v273, 0
        %v358 = vsel %vm357, %v273, 0
        %vm359 = vcmp.gt.s32.totalorder %v274, 0
        %v360 = vsel %vm359, %v274, 0
        %vm361 = vcmp.gt.s32.totalorder %v275, 0
        %v362 = vsel %vm361, %v275, 0
        %vm363 = vcmp.gt.s32.totalorder %v276, 0
        %v364 = vsel %vm363, %v276, 0
        %vm365 = vcmp.gt.s32.totalorder %v277, 0
        %v366 = vsel %vm365, %v277, 0
        %vm367 = vcmp.gt.s32.totalorder %v278, 0
        %v368 = vsel %vm367, %v278, 0
        %vm369 = vcmp.gt.s32.totalorder %v279, 0
        %v370 = vsel %vm369, %v279, 0
        %vm371 = vcmp.gt.s32.totalorder %v280, 0
        %v372 = vsel %vm371, %v280, 0
        %vm373 = vcmp.gt.s32.totalorder %v281, 0
        %v374 = vsel %vm373, %v281, 0
        %vm375 = vcmp.gt.s32.totalorder %v282, 0
        %v376 = vsel %vm375, %v282, 0
        %vm377 = vcmp.gt.s32.totalorder %v283, 0
        %v378 = vsel %vm377, %v283, 0
        %vm379 = vcmp.gt.s32.totalorder %v284, 0
        %v380 = vsel %vm379, %v284, 0
        %vm381 = vcmp.gt.s32.totalorder %v285, 0
        %v382 = vsel %vm381, %v285, 0
        %vm383 = vcmp.gt.s32.totalorder %v286, 0
        %v384 = vsel %vm383, %v286, 0
        %vm385 = vcmp.gt.s32.totalorder %v287, 0
        %v386 = vsel %vm385, %v287, 0
        %vm387 = vcmp.gt.s32.totalorder %v288, 0
        %v388 = vsel %vm387, %v288, 0
        %vm389 = vcmp.gt.s32.totalorder %v289, 0
        %v390 = vsel %vm389, %v289, 0
        %vm391 = vcmp.gt.s32.totalorder %v290, 0
        %v392 = vsel %vm391, %v290, 0
        %vm393 = vcmp.gt.s32.totalorder %v291, 0
        %v394 = vsel %vm393, %v291, 0
        %vm395 = vcmp.gt.s32.totalorder %v292, 0
        %v396 = vsel %vm395, %v292, 0
        %vm397 = vcmp.gt.s32.totalorder %v293, 0
        %v398 = vsel %vm397, %v293, 0
        %vm399 = vcmp.gt.s32.totalorder %v294, 0
        %v400 = vsel %vm399, %v294, 0
        %vm401 = vcmp.gt.s32.totalorder %v295, 0
        %v402 = vsel %vm401, %v295, 0
        %vm403 = vcmp.gt.s32.totalorder %v296, 0
        %v404 = vsel %vm403, %v296, 0
        %vm405 = vcmp.gt.s32.totalorder %v297, 0
        %v406 = vsel %vm405, %v297, 0
        %vm407 = vcmp.gt.s32.totalorder %v298, 0
        %v408 = vsel %vm407, %v298, 0
        %vm409 = vcmp.gt.s32.totalorder %v299, 0
        %v410 = vsel %vm409, %v299, 0
        %vm411 = vcmp.gt.s32.totalorder %v300, 0
        %v412 = vsel %vm411, %v300, 0
        %vm413 = vcmp.gt.s32.totalorder %v301, 0
        %v414 = vsel %vm413, %v301, 0
        %vm415 = vcmp.gt.s32.totalorder %v302, 0
        %v416 = vsel %vm415, %v302, 0
        %vm417 = vcmp.gt.s32.totalorder %v303, 0
        %v418 = vsel %vm417, %v303, 0
        %vm419 = vcmp.gt.s32.totalorder %v304, 0
        %v420 = vsel %vm419, %v304, 0
        %vm421 = vcmp.gt.s32.totalorder %v305, 0
        %v422 = vsel %vm421, %v305, 0
        %vm423 = vcmp.gt.s32.totalorder %v306, 0
        %v424 = vsel %vm423, %v306, 0
        %vm425 = vcmp.gt.s32.totalorder %v307, 0
        %v426 = vsel %vm425, %v307, 0
        %vm427 = vcmp.gt.s32.totalorder %v308, 0
        %v428 = vsel %vm427, %v308, 0
        %vm429 = vcmp.gt.s32.totalorder %v309, 0
        %v430 = vsel %vm429, %v309, 0
        %vm431 = vcmp.gt.s32.totalorder %v310, 0
        %v432 = vsel %vm431, %v310, 0
        %vm433 = vcmp.gt.s32.totalorder %v311, 0
        %v434 = vsel %vm433, %v311, 0
        %vm435 = vcmp.gt.s32.totalorder %v312, 0
        %v436 = vsel %vm435, %v312, 0
        %vm437 = vcmp.gt.s32.totalorder %v313, 0
        %v438 = vsel %vm437, %v313, 0
        %vm439 = vcmp.gt.s32.totalorder %v314, 0
        %v440 = vsel %vm439, %v314, 0
        %vm441 = vcmp.gt.s32.totalorder %v315, 0
        %v442 = vsel %vm441, %v315, 0
        %vm443 = vcmp.gt.s32.totalorder %v316, 0
        %v444 = vsel %vm443, %v316, 0
        %vm445 = vcmp.lt.s32.totalorder %v318, 383
        %v446 = vsel %vm445, %v318, 383
        %vm447 = vcmp.lt.s32.totalorder %v320, 383
        %v448 = vsel %vm447, %v320, 383
        %vm449 = vcmp.lt.s32.totalorder %v322, 383
        %v450 = vsel %vm449, %v322, 383
        %vm451 = vcmp.lt.s32.totalorder %v324, 383
        %v452 = vsel %vm451, %v324, 383
        %vm453 = vcmp.lt.s32.totalorder %v326, 383
        %v454 = vsel %vm453, %v326, 383
        %vm455 = vcmp.lt.s32.totalorder %v328, 383
        %v456 = vsel %vm455, %v328, 383
        %vm457 = vcmp.lt.s32.totalorder %v330, 383
        %v458 = vsel %vm457, %v330, 383
        %vm459 = vcmp.lt.s32.totalorder %v332, 383
        %v460 = vsel %vm459, %v332, 383
        %vm461 = vcmp.lt.s32.totalorder %v334, 383
        %v462 = vsel %vm461, %v334, 383
        %vm463 = vcmp.lt.s32.totalorder %v336, 383
        %v464 = vsel %vm463, %v336, 383
        %vm465 = vcmp.lt.s32.totalorder %v338, 383
        %v466 = vsel %vm465, %v338, 383
        %vm467 = vcmp.lt.s32.totalorder %v340, 383
        %v468 = vsel %vm467, %v340, 383
        %vm469 = vcmp.lt.s32.totalorder %v342, 383
        %v470 = vsel %vm469, %v342, 383
        %vm471 = vcmp.lt.s32.totalorder %v344, 383
        %v472 = vsel %vm471, %v344, 383
        %vm473 = vcmp.lt.s32.totalorder %v346, 383
        %v474 = vsel %vm473, %v346, 383
        %vm475 = vcmp.lt.s32.totalorder %v348, 383
        %v476 = vsel %vm475, %v348, 383
        %vm477 = vcmp.lt.s32.totalorder %v350, 383
        %v478 = vsel %vm477, %v350, 383
        %vm479 = vcmp.lt.s32.totalorder %v352, 383
        %v480 = vsel %vm479, %v352, 383
        %vm481 = vcmp.lt.s32.totalorder %v354, 383
        %v482 = vsel %vm481, %v354, 383
        %vm483 = vcmp.lt.s32.totalorder %v356, 383
        %v484 = vsel %vm483, %v356, 383
        %vm485 = vcmp.lt.s32.totalorder %v358, 383
        %v486 = vsel %vm485, %v358, 383
        %vm487 = vcmp.lt.s32.totalorder %v360, 383
        %v488 = vsel %vm487, %v360, 383
        %vm489 = vcmp.lt.s32.totalorder %v362, 383
        %v490 = vsel %vm489, %v362, 383
        %vm491 = vcmp.lt.s32.totalorder %v364, 383
        %v492 = vsel %vm491, %v364, 383
        %vm493 = vcmp.lt.s32.totalorder %v366, 383
        %v494 = vsel %vm493, %v366, 383
        %vm495 = vcmp.lt.s32.totalorder %v368, 383
        %v496 = vsel %vm495, %v368, 383
        %vm497 = vcmp.lt.s32.totalorder %v370, 383
        %v498 = vsel %vm497, %v370, 383
        %vm499 = vcmp.lt.s32.totalorder %v372, 383
        %v500 = vsel %vm499, %v372, 383
        %vm501 = vcmp.lt.s32.totalorder %v374, 383
        %v502 = vsel %vm501, %v374, 383
        %vm503 = vcmp.lt.s32.totalorder %v376, 383
        %v504 = vsel %vm503, %v376, 383
        %vm505 = vcmp.lt.s32.totalorder %v378, 383
        %v506 = vsel %vm505, %v378, 383
        %vm507 = vcmp.lt.s32.totalorder %v380, 383
        %v508 = vsel %vm507, %v380, 383
        %vm509 = vcmp.lt.s32.totalorder %v382, 383
        %v510 = vsel %vm509, %v382, 383
        %vm511 = vcmp.lt.s32.totalorder %v384, 383
        %v512 = vsel %vm511, %v384, 383
        %vm513 = vcmp.lt.s32.totalorder %v386, 383
        %v514 = vsel %vm513, %v386, 383
        %vm515 = vcmp.lt.s32.totalorder %v388, 383
        %v516 = vsel %vm515, %v388, 383
        %vm517 = vcmp.lt.s32.totalorder %v390, 383
        %v518 = vsel %vm517, %v390, 383
        %vm519 = vcmp.lt.s32.totalorder %v392, 383
        %v520 = vsel %vm519, %v392, 383
        %vm521 = vcmp.lt.s32.totalorder %v394, 383
        %v522 = vsel %vm521, %v394, 383
        %vm523 = vcmp.lt.s32.totalorder %v396, 383
        %v524 = vsel %vm523, %v396, 383
        %vm525 = vcmp.lt.s32.totalorder %v398, 383
        %v526 = vsel %vm525, %v398, 383
        %vm527 = vcmp.lt.s32.totalorder %v400, 383
        %v528 = vsel %vm527, %v400, 383
        %vm529 = vcmp.lt.s32.totalorder %v402, 383
        %v530 = vsel %vm529, %v402, 383
        %vm531 = vcmp.lt.s32.totalorder %v404, 383
        %v532 = vsel %vm531, %v404, 383
        %vm533 = vcmp.lt.s32.totalorder %v406, 383
        %v534 = vsel %vm533, %v406, 383
        %vm535 = vcmp.lt.s32.totalorder %v408, 383
        %v536 = vsel %vm535, %v408, 383
        %vm537 = vcmp.lt.s32.totalorder %v410, 383
        %v538 = vsel %vm537, %v410, 383
        %vm539 = vcmp.lt.s32.totalorder %v412, 383
        %v540 = vsel %vm539, %v412, 383
        %vm541 = vcmp.lt.s32.totalorder %v414, 383
        %v542 = vsel %vm541, %v414, 383
        %vm543 = vcmp.lt.s32.totalorder %v416, 383
        %v544 = vsel %vm543, %v416, 383
        %vm545 = vcmp.lt.s32.totalorder %v418, 383
        %v546 = vsel %vm545, %v418, 383
        %vm547 = vcmp.lt.s32.totalorder %v420, 383
        %v548 = vsel %vm547, %v420, 383
        %vm549 = vcmp.lt.s32.totalorder %v422, 383
        %v550 = vsel %vm549, %v422, 383
        %vm551 = vcmp.lt.s32.totalorder %v424, 383
        %v552 = vsel %vm551, %v424, 383
        %vm553 = vcmp.lt.s32.totalorder %v426, 383
        %v554 = vsel %vm553, %v426, 383
        %vm555 = vcmp.lt.s32.totalorder %v428, 383
        %v556 = vsel %vm555, %v428, 383
        %vm557 = vcmp.lt.s32.totalorder %v430, 383
        %v558 = vsel %vm557, %v430, 383
        %vm559 = vcmp.lt.s32.totalorder %v432, 383
        %v560 = vsel %vm559, %v432, 383
        %vm561 = vcmp.lt.s32.totalorder %v434, 383
        %v562 = vsel %vm561, %v434, 383
        %vm563 = vcmp.lt.s32.totalorder %v436, 383
        %v564 = vsel %vm563, %v436, 383
        %vm565 = vcmp.lt.s32.totalorder %v438, 383
        %v566 = vsel %vm565, %v438, 383
        %vm567 = vcmp.lt.s32.totalorder %v440, 383
        %v568 = vsel %vm567, %v440, 383
        %vm569 = vcmp.lt.s32.totalorder %v442, 383
        %v570 = vsel %vm569, %v442, 383
        %vm571 = vcmp.lt.s32.totalorder %v444, 383
        %v572 = vsel %vm571, %v444, 383
        %v573 = vlaneseq
        %v574 = vand.u32 %v573, 127
        %v575 = vadd.s32 %v574, 128
        %v576 = vadd.s32 %v574, 256
        %577 = vset.pattern.permute.xlu0 0
        %578 = vperm.xlu0 %577, %v446
        %v579 = vpop.permute.xlu0 %578
        %580 = vset.pattern.permute.xlu0 0
        %581 = vperm.xlu0 %580, %v448
        %v582 = vpop.permute.xlu0 %581
        %583 = vset.pattern.permute.xlu0 0
        %584 = vperm.xlu0 %583, %v450
        %v585 = vpop.permute.xlu0 %584
        %586 = vset.pattern.permute.xlu0 0
        %587 = vperm.xlu0 %586, %v452
        %v588 = vpop.permute.xlu0 %587
        %589 = vset.pattern.permute.xlu0 0
        %590 = vperm.xlu0 %589, %v454
        %v591 = vpop.permute.xlu0 %590
        %592 = vset.pattern.permute.xlu0 0
        %593 = vperm.xlu0 %592, %v456
        %v594 = vpop.permute.xlu0 %593
        %595 = vset.pattern.permute.xlu0 0
        %596 = vperm.xlu0 %595, %v458
        %v597 = vpop.permute.xlu0 %596
        %598 = vset.pattern.permute.xlu0 0
        %599 = vperm.xlu0 %598, %v460
        %v600 = vpop.permute.xlu0 %599
        %601 = vset.pattern.permute.xlu0 0
        %602 = vperm.xlu0 %601, %v462
        %v603 = vpop.permute.xlu0 %602
        %604 = vset.pattern.permute.xlu0 0
        %605 = vperm.xlu0 %604, %v464
        %v606 = vpop.permute.xlu0 %605
        %607 = vset.pattern.permute.xlu0 0
        %608 = vperm.xlu0 %607, %v466
        %v609 = vpop.permute.xlu0 %608
        %610 = vset.pattern.permute.xlu0 0
        %611 = vperm.xlu0 %610, %v468
        %v612 = vpop.permute.xlu0 %611
        %613 = vset.pattern.permute.xlu0 0
        %614 = vperm.xlu0 %613, %v470
        %v615 = vpop.permute.xlu0 %614
        %616 = vset.pattern.permute.xlu0 0
        %617 = vperm.xlu0 %616, %v472
        %v618 = vpop.permute.xlu0 %617
        %619 = vset.pattern.permute.xlu0 0
        %620 = vperm.xlu0 %619, %v474
        %v621 = vpop.permute.xlu0 %620
        %622 = vset.pattern.permute.xlu0 0
        %623 = vperm.xlu0 %622, %v476
        %v624 = vpop.permute.xlu0 %623
        %625 = vset.pattern.permute.xlu0 0
        %626 = vperm.xlu0 %625, %v478
        %v627 = vpop.permute.xlu0 %626
        %628 = vset.pattern.permute.xlu0 0
        %629 = vperm.xlu0 %628, %v480
        %v630 = vpop.permute.xlu0 %629
        %631 = vset.pattern.permute.xlu0 0
        %632 = vperm.xlu0 %631, %v482
        %v633 = vpop.permute.xlu0 %632
        %634 = vset.pattern.permute.xlu0 0
        %635 = vperm.xlu0 %634, %v484
        %v636 = vpop.permute.xlu0 %635
        %637 = vset.pattern.permute.xlu0 0
        %638 = vperm.xlu0 %637, %v486
        %v639 = vpop.permute.xlu0 %638
        %640 = vset.pattern.permute.xlu0 0
        %641 = vperm.xlu0 %640, %v488
        %v642 = vpop.permute.xlu0 %641
        %643 = vset.pattern.permute.xlu0 0
        %644 = vperm.xlu0 %643, %v490
        %v645 = vpop.permute.xlu0 %644
        %646 = vset.pattern.permute.xlu0 0
        %647 = vperm.xlu0 %646, %v492
        %v648 = vpop.permute.xlu0 %647
        %649 = vset.pattern.permute.xlu0 0
        %650 = vperm.xlu0 %649, %v494
        %v651 = vpop.permute.xlu0 %650
        %652 = vset.pattern.permute.xlu0 0
        %653 = vperm.xlu0 %652, %v496
        %v654 = vpop.permute.xlu0 %653
        %655 = vset.pattern.permute.xlu0 0
        %656 = vperm.xlu0 %655, %v498
        %v657 = vpop.permute.xlu0 %656
        %658 = vset.pattern.permute.xlu0 0
        %659 = vperm.xlu0 %658, %v500
        %v660 = vpop.permute.xlu0 %659
        %661 = vset.pattern.permute.xlu0 0
        %662 = vperm.xlu0 %661, %v502
        %v663 = vpop.permute.xlu0 %662
        %664 = vset.pattern.permute.xlu0 0
        %665 = vperm.xlu0 %664, %v504
        %v666 = vpop.permute.xlu0 %665
        %667 = vset.pattern.permute.xlu0 0
        %668 = vperm.xlu0 %667, %v506
        %v669 = vpop.permute.xlu0 %668
        %670 = vset.pattern.permute.xlu0 0
        %671 = vperm.xlu0 %670, %v508
        %v672 = vpop.permute.xlu0 %671
        %673 = vset.pattern.permute.xlu0 0
        %674 = vperm.xlu0 %673, %v510
        %v675 = vpop.permute.xlu0 %674
        %676 = vset.pattern.permute.xlu0 0
        %677 = vperm.xlu0 %676, %v512
        %v678 = vpop.permute.xlu0 %677
        %679 = vset.pattern.permute.xlu0 0
        %680 = vperm.xlu0 %679, %v514
        %v681 = vpop.permute.xlu0 %680
        %682 = vset.pattern.permute.xlu0 0
        %683 = vperm.xlu0 %682, %v516
        %v684 = vpop.permute.xlu0 %683
        %685 = vset.pattern.permute.xlu0 0
        %686 = vperm.xlu0 %685, %v518
        %v687 = vpop.permute.xlu0 %686
        %688 = vset.pattern.permute.xlu0 0
        %689 = vperm.xlu0 %688, %v520
        %v690 = vpop.permute.xlu0 %689
        %691 = vset.pattern.permute.xlu0 0
        %692 = vperm.xlu0 %691, %v522
        %v693 = vpop.permute.xlu0 %692
        %694 = vset.pattern.permute.xlu0 0
        %695 = vperm.xlu0 %694, %v524
        %v696 = vpop.permute.xlu0 %695
        %697 = vset.pattern.permute.xlu0 0
        %698 = vperm.xlu0 %697, %v526
        %v699 = vpop.permute.xlu0 %698
        %700 = vset.pattern.permute.xlu0 0
        %701 = vperm.xlu0 %700, %v528
        %v702 = vpop.permute.xlu0 %701
        %703 = vset.pattern.permute.xlu0 0
        %704 = vperm.xlu0 %703, %v530
        %v705 = vpop.permute.xlu0 %704
        %706 = vset.pattern.permute.xlu0 0
        %707 = vperm.xlu0 %706, %v532
        %v708 = vpop.permute.xlu0 %707
        %709 = vset.pattern.permute.xlu0 0
        %710 = vperm.xlu0 %709, %v534
        %v711 = vpop.permute.xlu0 %710
        %712 = vset.pattern.permute.xlu0 0
        %713 = vperm.xlu0 %712, %v536
        %v714 = vpop.permute.xlu0 %713
        %715 = vset.pattern.permute.xlu0 0
        %716 = vperm.xlu0 %715, %v538
        %v717 = vpop.permute.xlu0 %716
        %718 = vset.pattern.permute.xlu0 0
        %719 = vperm.xlu0 %718, %v540
        %v720 = vpop.permute.xlu0 %719
        %721 = vset.pattern.permute.xlu0 0
        %722 = vperm.xlu0 %721, %v542
        %v723 = vpop.permute.xlu0 %722
        %724 = vset.pattern.permute.xlu0 0
        %725 = vperm.xlu0 %724, %v544
        %v726 = vpop.permute.xlu0 %725
        %727 = vset.pattern.permute.xlu0 0
        %728 = vperm.xlu0 %727, %v546
        %v729 = vpop.permute.xlu0 %728
        %730 = vset.pattern.permute.xlu0 0
        %731 = vperm.xlu0 %730, %v548
        %v732 = vpop.permute.xlu0 %731
        %733 = vset.pattern.permute.xlu0 0
        %734 = vperm.xlu0 %733, %v550
        %v735 = vpop.permute.xlu0 %734
        %736 = vset.pattern.permute.xlu0 0
        %737 = vperm.xlu0 %736, %v552
        %v738 = vpop.permute.xlu0 %737
        %739 = vset.pattern.permute.xlu0 0
        %740 = vperm.xlu0 %739, %v554
        %v741 = vpop.permute.xlu0 %740
        %742 = vset.pattern.permute.xlu0 0
        %743 = vperm.xlu0 %742, %v556
        %v744 = vpop.permute.xlu0 %743
        %745 = vset.pattern.permute.xlu0 0
        %746 = vperm.xlu0 %745, %v558
        %v747 = vpop.permute.xlu0 %746
        %748 = vset.pattern.permute.xlu0 0
        %749 = vperm.xlu0 %748, %v560
        %v750 = vpop.permute.xlu0 %749
        %751 = vset.pattern.permute.xlu0 0
        %752 = vperm.xlu0 %751, %v562
        %v753 = vpop.permute.xlu0 %752
        %754 = vset.pattern.permute.xlu0 0
        %755 = vperm.xlu0 %754, %v564
        %v756 = vpop.permute.xlu0 %755
        %757 = vset.pattern.permute.xlu0 0
        %758 = vperm.xlu0 %757, %v566
        %v759 = vpop.permute.xlu0 %758
        %760 = vset.pattern.permute.xlu0 0
        %761 = vperm.xlu0 %760, %v568
        %v762 = vpop.permute.xlu0 %761
        %763 = vset.pattern.permute.xlu0 0
        %764 = vperm.xlu0 %763, %v570
        %v765 = vpop.permute.xlu0 %764
        %766 = vset.pattern.permute.xlu0 0
        %767 = vperm.xlu0 %766, %v572
        %v768 = vpop.permute.xlu0 %767
        %vm769 = vcmp.eq.s32.totalorder %v579, %v574
        %vm770 = vcmp.eq.s32.totalorder %v579, %v575
        %vm771 = vcmp.eq.s32.totalorder %v579, %v576
        %vm772 = vcmp.eq.s32.totalorder %v582, %v574
        %vm773 = vcmp.eq.s32.totalorder %v582, %v575
        %vm774 = vcmp.eq.s32.totalorder %v582, %v576
        %vm775 = vcmp.eq.s32.totalorder %v585, %v574
        %vm776 = vcmp.eq.s32.totalorder %v585, %v575
        %vm777 = vcmp.eq.s32.totalorder %v585, %v576
        %vm778 = vcmp.eq.s32.totalorder %v588, %v574
        %vm779 = vcmp.eq.s32.totalorder %v588, %v575
        %vm780 = vcmp.eq.s32.totalorder %v588, %v576
        %vm781 = vcmp.eq.s32.totalorder %v591, %v574
        %vm782 = vcmp.eq.s32.totalorder %v591, %v575
        %vm783 = vcmp.eq.s32.totalorder %v591, %v576
        %vm784 = vcmp.eq.s32.totalorder %v594, %v574
        %vm785 = vcmp.eq.s32.totalorder %v594, %v575
        %vm786 = vcmp.eq.s32.totalorder %v594, %v576
        %vm787 = vcmp.eq.s32.totalorder %v597, %v574
        %vm788 = vcmp.eq.s32.totalorder %v597, %v575
        %vm789 = vcmp.eq.s32.totalorder %v597, %v576
        %vm790 = vcmp.eq.s32.totalorder %v600, %v574
        %vm791 = vcmp.eq.s32.totalorder %v600, %v575
        %vm792 = vcmp.eq.s32.totalorder %v600, %v576
        %vm793 = vcmp.eq.s32.totalorder %v603, %v574
        %vm794 = vcmp.eq.s32.totalorder %v603, %v575
        %vm795 = vcmp.eq.s32.totalorder %v603, %v576
        %vm796 = vcmp.eq.s32.totalorder %v606, %v574
        %vm797 = vcmp.eq.s32.totalorder %v606, %v575
        %vm798 = vcmp.eq.s32.totalorder %v606, %v576
        %vm799 = vcmp.eq.s32.totalorder %v609, %v574
        %vm800 = vcmp.eq.s32.totalorder %v609, %v575
        %vm801 = vcmp.eq.s32.totalorder %v609, %v576
        %vm802 = vcmp.eq.s32.totalorder %v612, %v574
        %vm803 = vcmp.eq.s32.totalorder %v612, %v575
        %vm804 = vcmp.eq.s32.totalorder %v612, %v576
        %vm805 = vcmp.eq.s32.totalorder %v615, %v574
        %vm806 = vcmp.eq.s32.totalorder %v615, %v575
        %vm807 = vcmp.eq.s32.totalorder %v615, %v576
        %vm808 = vcmp.eq.s32.totalorder %v618, %v574
        %vm809 = vcmp.eq.s32.totalorder %v618, %v575
        %vm810 = vcmp.eq.s32.totalorder %v618, %v576
        %vm811 = vcmp.eq.s32.totalorder %v621, %v574
        %vm812 = vcmp.eq.s32.totalorder %v621, %v575
        %vm813 = vcmp.eq.s32.totalorder %v621, %v576
        %vm814 = vcmp.eq.s32.totalorder %v624, %v574
        %vm815 = vcmp.eq.s32.totalorder %v624, %v575
        %vm816 = vcmp.eq.s32.totalorder %v624, %v576
        %vm817 = vcmp.eq.s32.totalorder %v627, %v574
        %vm818 = vcmp.eq.s32.totalorder %v627, %v575
        %vm819 = vcmp.eq.s32.totalorder %v627, %v576
        %vm820 = vcmp.eq.s32.totalorder %v630, %v574
        %vm821 = vcmp.eq.s32.totalorder %v630, %v575
        %vm822 = vcmp.eq.s32.totalorder %v630, %v576
        %vm823 = vcmp.eq.s32.totalorder %v633, %v574
        %vm824 = vcmp.eq.s32.totalorder %v633, %v575
        %vm825 = vcmp.eq.s32.totalorder %v633, %v576
        %vm826 = vcmp.eq.s32.totalorder %v636, %v574
        %vm827 = vcmp.eq.s32.totalorder %v636, %v575
        %vm828 = vcmp.eq.s32.totalorder %v636, %v576
        %vm829 = vcmp.eq.s32.totalorder %v639, %v574
        %vm830 = vcmp.eq.s32.totalorder %v639, %v575
        %vm831 = vcmp.eq.s32.totalorder %v639, %v576
        %vm832 = vcmp.eq.s32.totalorder %v642, %v574
        %vm833 = vcmp.eq.s32.totalorder %v642, %v575
        %vm834 = vcmp.eq.s32.totalorder %v642, %v576
        %vm835 = vcmp.eq.s32.totalorder %v645, %v574
        %vm836 = vcmp.eq.s32.totalorder %v645, %v575
        %vm837 = vcmp.eq.s32.totalorder %v645, %v576
        %vm838 = vcmp.eq.s32.totalorder %v648, %v574
        %vm839 = vcmp.eq.s32.totalorder %v648, %v575
        %vm840 = vcmp.eq.s32.totalorder %v648, %v576
        %vm841 = vcmp.eq.s32.totalorder %v651, %v574
        %vm842 = vcmp.eq.s32.totalorder %v651, %v575
        %vm843 = vcmp.eq.s32.totalorder %v651, %v576
        %vm844 = vcmp.eq.s32.totalorder %v654, %v574
        %vm845 = vcmp.eq.s32.totalorder %v654, %v575
        %vm846 = vcmp.eq.s32.totalorder %v654, %v576
        %vm847 = vcmp.eq.s32.totalorder %v657, %v574
        %vm848 = vcmp.eq.s32.totalorder %v657, %v575
        %vm849 = vcmp.eq.s32.totalorder %v657, %v576
        %vm850 = vcmp.eq.s32.totalorder %v660, %v574
        %vm851 = vcmp.eq.s32.totalorder %v660, %v575
        %vm852 = vcmp.eq.s32.totalorder %v660, %v576
        %vm853 = vcmp.eq.s32.totalorder %v663, %v574
        %vm854 = vcmp.eq.s32.totalorder %v663, %v575
        %vm855 = vcmp.eq.s32.totalorder %v663, %v576
        %vm856 = vcmp.eq.s32.totalorder %v666, %v574
        %vm857 = vcmp.eq.s32.totalorder %v666, %v575
        %vm858 = vcmp.eq.s32.totalorder %v666, %v576
        %vm859 = vcmp.eq.s32.totalorder %v669, %v574
        %vm860 = vcmp.eq.s32.totalorder %v669, %v575
        %vm861 = vcmp.eq.s32.totalorder %v669, %v576
        %vm862 = vcmp.eq.s32.totalorder %v672, %v574
        %vm863 = vcmp.eq.s32.totalorder %v672, %v575
        %vm864 = vcmp.eq.s32.totalorder %v672, %v576
        %vm865 = vcmp.eq.s32.totalorder %v675, %v574
        %vm866 = vcmp.eq.s32.totalorder %v675, %v575
        %vm867 = vcmp.eq.s32.totalorder %v675, %v576
        %vm868 = vcmp.eq.s32.totalorder %v678, %v574
        %vm869 = vcmp.eq.s32.totalorder %v678, %v575
        %vm870 = vcmp.eq.s32.totalorder %v678, %v576
        %vm871 = vcmp.eq.s32.totalorder %v681, %v574
        %vm872 = vcmp.eq.s32.totalorder %v681, %v575
        %vm873 = vcmp.eq.s32.totalorder %v681, %v576
        %vm874 = vcmp.eq.s32.totalorder %v684, %v574
        %vm875 = vcmp.eq.s32.totalorder %v684, %v575
        %vm876 = vcmp.eq.s32.totalorder %v684, %v576
        %vm877 = vcmp.eq.s32.totalorder %v687, %v574
        %vm878 = vcmp.eq.s32.totalorder %v687, %v575
        %vm879 = vcmp.eq.s32.totalorder %v687, %v576
        %vm880 = vcmp.eq.s32.totalorder %v690, %v574
        %vm881 = vcmp.eq.s32.totalorder %v690, %v575
        %vm882 = vcmp.eq.s32.totalorder %v690, %v576
        %vm883 = vcmp.eq.s32.totalorder %v693, %v574
        %vm884 = vcmp.eq.s32.totalorder %v693, %v575
        %vm885 = vcmp.eq.s32.totalorder %v693, %v576
        %vm886 = vcmp.eq.s32.totalorder %v696, %v574
        %vm887 = vcmp.eq.s32.totalorder %v696, %v575
        %vm888 = vcmp.eq.s32.totalorder %v696, %v576
        %vm889 = vcmp.eq.s32.totalorder %v699, %v574
        %vm890 = vcmp.eq.s32.totalorder %v699, %v575
        %vm891 = vcmp.eq.s32.totalorder %v699, %v576
        %vm892 = vcmp.eq.s32.totalorder %v702, %v574
        %vm893 = vcmp.eq.s32.totalorder %v702, %v575
        %vm894 = vcmp.eq.s32.totalorder %v702, %v576
        %vm895 = vcmp.eq.s32.totalorder %v705, %v574
        %vm896 = vcmp.eq.s32.totalorder %v705, %v575
        %vm897 = vcmp.eq.s32.totalorder %v705, %v576
        %vm898 = vcmp.eq.s32.totalorder %v708, %v574
        %vm899 = vcmp.eq.s32.totalorder %v708, %v575
        %vm900 = vcmp.eq.s32.totalorder %v708, %v576
        %vm901 = vcmp.eq.s32.totalorder %v711, %v574
        %vm902 = vcmp.eq.s32.totalorder %v711, %v575
        %vm903 = vcmp.eq.s32.totalorder %v711, %v576
        %vm904 = vcmp.eq.s32.totalorder %v714, %v574
        %vm905 = vcmp.eq.s32.totalorder %v714, %v575
        %vm906 = vcmp.eq.s32.totalorder %v714, %v576
        %vm907 = vcmp.eq.s32.totalorder %v717, %v574
        %vm908 = vcmp.eq.s32.totalorder %v717, %v575
        %vm909 = vcmp.eq.s32.totalorder %v717, %v576
        %vm910 = vcmp.eq.s32.totalorder %v720, %v574
        %vm911 = vcmp.eq.s32.totalorder %v720, %v575
        %vm912 = vcmp.eq.s32.totalorder %v720, %v576
        %vm913 = vcmp.eq.s32.totalorder %v723, %v574
        %vm914 = vcmp.eq.s32.totalorder %v723, %v575
        %vm915 = vcmp.eq.s32.totalorder %v723, %v576
        %vm916 = vcmp.eq.s32.totalorder %v726, %v574
        %vm917 = vcmp.eq.s32.totalorder %v726, %v575
        %vm918 = vcmp.eq.s32.totalorder %v726, %v576
        %vm919 = vcmp.eq.s32.totalorder %v729, %v574
        %vm920 = vcmp.eq.s32.totalorder %v729, %v575
        %vm921 = vcmp.eq.s32.totalorder %v729, %v576
        %vm922 = vcmp.eq.s32.totalorder %v732, %v574
        %vm923 = vcmp.eq.s32.totalorder %v732, %v575
        %vm924 = vcmp.eq.s32.totalorder %v732, %v576
        %vm925 = vcmp.eq.s32.totalorder %v735, %v574
        %vm926 = vcmp.eq.s32.totalorder %v735, %v575
        %vm927 = vcmp.eq.s32.totalorder %v735, %v576
        %vm928 = vcmp.eq.s32.totalorder %v738, %v574
        %vm929 = vcmp.eq.s32.totalorder %v738, %v575
        %vm930 = vcmp.eq.s32.totalorder %v738, %v576
        %vm931 = vcmp.eq.s32.totalorder %v741, %v574
        %vm932 = vcmp.eq.s32.totalorder %v741, %v575
        %vm933 = vcmp.eq.s32.totalorder %v741, %v576
        %vm934 = vcmp.eq.s32.totalorder %v744, %v574
        %vm935 = vcmp.eq.s32.totalorder %v744, %v575
        %vm936 = vcmp.eq.s32.totalorder %v744, %v576
        %vm937 = vcmp.eq.s32.totalorder %v747, %v574
        %vm938 = vcmp.eq.s32.totalorder %v747, %v575
        %vm939 = vcmp.eq.s32.totalorder %v747, %v576
        %vm940 = vcmp.eq.s32.totalorder %v750, %v574
        %vm941 = vcmp.eq.s32.totalorder %v750, %v575
        %vm942 = vcmp.eq.s32.totalorder %v750, %v576
        %vm943 = vcmp.eq.s32.totalorder %v753, %v574
        %vm944 = vcmp.eq.s32.totalorder %v753, %v575
        %vm945 = vcmp.eq.s32.totalorder %v753, %v576
        %vm946 = vcmp.eq.s32.totalorder %v756, %v574
        %vm947 = vcmp.eq.s32.totalorder %v756, %v575
        %vm948 = vcmp.eq.s32.totalorder %v756, %v576
        %vm949 = vcmp.eq.s32.totalorder %v759, %v574
        %vm950 = vcmp.eq.s32.totalorder %v759, %v575
        %vm951 = vcmp.eq.s32.totalorder %v759, %v576
        %vm952 = vcmp.eq.s32.totalorder %v762, %v574
        %vm953 = vcmp.eq.s32.totalorder %v762, %v575
        %vm954 = vcmp.eq.s32.totalorder %v762, %v576
        %vm955 = vcmp.eq.s32.totalorder %v765, %v574
        %vm956 = vcmp.eq.s32.totalorder %v765, %v575
        %vm957 = vcmp.eq.s32.totalorder %v765, %v576
        %vm958 = vcmp.eq.s32.totalorder %v768, %v574
        %vm959 = vcmp.eq.s32.totalorder %v768, %v575
        %vm960 = vcmp.eq.s32.totalorder %v768, %v576
        %v961 = vsel %vm769, 1, 0
        %v962 = vsel %vm770, 1, 0
        %v963 = vsel %vm771, 1, 0
        %v964 = vsel %vm772, 1, 0
        %v965 = vsel %vm773, 1, 0
        %v966 = vsel %vm774, 1, 0
        %v967 = vsel %vm775, 1, 0
        %v968 = vsel %vm776, 1, 0
        %v969 = vsel %vm777, 1, 0
        %v970 = vsel %vm778, 1, 0
        %v971 = vsel %vm779, 1, 0
        %v972 = vsel %vm780, 1, 0
        %v973 = vsel %vm781, 1, 0
        %v974 = vsel %vm782, 1, 0
        %v975 = vsel %vm783, 1, 0
        %v976 = vsel %vm784, 1, 0
        %v977 = vsel %vm785, 1, 0
        %v978 = vsel %vm786, 1, 0
        %v979 = vsel %vm787, 1, 0
        %v980 = vsel %vm788, 1, 0
        %v981 = vsel %vm789, 1, 0
        %v982 = vsel %vm790, 1, 0
        %v983 = vsel %vm791, 1, 0
        %v984 = vsel %vm792, 1, 0
        %v985 = vsel %vm793, 1, 0
        %v986 = vsel %vm794, 1, 0
        %v987 = vsel %vm795, 1, 0
        %v988 = vsel %vm796, 1, 0
        %v989 = vsel %vm797, 1, 0
        %v990 = vsel %vm798, 1, 0
        %v991 = vsel %vm799, 1, 0
        %v992 = vsel %vm800, 1, 0
        %v993 = vsel %vm801, 1, 0
        %v994 = vsel %vm802, 1, 0
        %v995 = vsel %vm803, 1, 0
        %v996 = vsel %vm804, 1, 0
        %v997 = vsel %vm805, 1, 0
        %v998 = vsel %vm806, 1, 0
        %v999 = vsel %vm807, 1, 0
        %v1000 = vsel %vm808, 1, 0
        %v1001 = vsel %vm809, 1, 0
        %v1002 = vsel %vm810, 1, 0
        %v1003 = vsel %vm811, 1, 0
        %v1004 = vsel %vm812, 1, 0
        %v1005 = vsel %vm813, 1, 0
        %v1006 = vsel %vm814, 1, 0
        %v1007 = vsel %vm815, 1, 0
        %v1008 = vsel %vm816, 1, 0
        %v1009 = vsel %vm817, 1, 0
        %v1010 = vsel %vm818, 1, 0
        %v1011 = vsel %vm819, 1, 0
        %v1012 = vsel %vm820, 1, 0
        %v1013 = vsel %vm821, 1, 0
        %v1014 = vsel %vm822, 1, 0
        %v1015 = vsel %vm823, 1, 0
        %v1016 = vsel %vm824, 1, 0
        %v1017 = vsel %vm825, 1, 0
        %v1018 = vsel %vm826, 1, 0
        %v1019 = vsel %vm827, 1, 0
        %v1020 = vsel %vm828, 1, 0
        %v1021 = vsel %vm829, 1, 0
        %v1022 = vsel %vm830, 1, 0
        %v1023 = vsel %vm831, 1, 0
        %v1024 = vsel %vm832, 1, 0
        %v1025 = vsel %vm833, 1, 0
        %v1026 = vsel %vm834, 1, 0
        %v1027 = vsel %vm835, 1, 0
        %v1028 = vsel %vm836, 1, 0
        %v1029 = vsel %vm837, 1, 0
        %v1030 = vsel %vm838, 1, 0
        %v1031 = vsel %vm839, 1, 0
        %v1032 = vsel %vm840, 1, 0
        %v1033 = vsel %vm841, 1, 0
        %v1034 = vsel %vm842, 1, 0
        %v1035 = vsel %vm843, 1, 0
        %v1036 = vsel %vm844, 1, 0
        %v1037 = vsel %vm845, 1, 0
        %v1038 = vsel %vm846, 1, 0
        %v1039 = vsel %vm847, 1, 0
        %v1040 = vsel %vm848, 1, 0
        %v1041 = vsel %vm849, 1, 0
        %v1042 = vsel %vm850, 1, 0
        %v1043 = vsel %vm851, 1, 0
        %v1044 = vsel %vm852, 1, 0
        %v1045 = vsel %vm853, 1, 0
        %v1046 = vsel %vm854, 1, 0
        %v1047 = vsel %vm855, 1, 0
        %v1048 = vsel %vm856, 1, 0
        %v1049 = vsel %vm857, 1, 0
        %v1050 = vsel %vm858, 1, 0
        %v1051 = vsel %vm859, 1, 0
        %v1052 = vsel %vm860, 1, 0
        %v1053 = vsel %vm861, 1, 0
        %v1054 = vsel %vm862, 1, 0
        %v1055 = vsel %vm863, 1, 0
        %v1056 = vsel %vm864, 1, 0
        %v1057 = vsel %vm865, 1, 0
        %v1058 = vsel %vm866, 1, 0
        %v1059 = vsel %vm867, 1, 0
        %v1060 = vsel %vm868, 1, 0
        %v1061 = vsel %vm869, 1, 0
        %v1062 = vsel %vm870, 1, 0
        %v1063 = vsel %vm871, 1, 0
        %v1064 = vsel %vm872, 1, 0
        %v1065 = vsel %vm873, 1, 0
        %v1066 = vsel %vm874, 1, 0
        %v1067 = vsel %vm875, 1, 0
        %v1068 = vsel %vm876, 1, 0
        %v1069 = vsel %vm877, 1, 0
        %v1070 = vsel %vm878, 1, 0
        %v1071 = vsel %vm879, 1, 0
        %v1072 = vsel %vm880, 1, 0
        %v1073 = vsel %vm881, 1, 0
        %v1074 = vsel %vm882, 1, 0
        %v1075 = vsel %vm883, 1, 0
        %v1076 = vsel %vm884, 1, 0
        %v1077 = vsel %vm885, 1, 0
        %v1078 = vsel %vm886, 1, 0
        %v1079 = vsel %vm887, 1, 0
        %v1080 = vsel %vm888, 1, 0
        %v1081 = vsel %vm889, 1, 0
        %v1082 = vsel %vm890, 1, 0
        %v1083 = vsel %vm891, 1, 0
        %v1084 = vsel %vm892, 1, 0
        %v1085 = vsel %vm893, 1, 0
        %v1086 = vsel %vm894, 1, 0
        %v1087 = vsel %vm895, 1, 0
        %v1088 = vsel %vm896, 1, 0
        %v1089 = vsel %vm897, 1, 0
        %v1090 = vsel %vm898, 1, 0
        %v1091 = vsel %vm899, 1, 0
        %v1092 = vsel %vm900, 1, 0
        %v1093 = vsel %vm901, 1, 0
        %v1094 = vsel %vm902, 1, 0
        %v1095 = vsel %vm903, 1, 0
        %v1096 = vsel %vm904, 1, 0
        %v1097 = vsel %vm905, 1, 0
        %v1098 = vsel %vm906, 1, 0
        %v1099 = vsel %vm907, 1, 0
        %v1100 = vsel %vm908, 1, 0
        %v1101 = vsel %vm909, 1, 0
        %v1102 = vsel %vm910, 1, 0
        %v1103 = vsel %vm911, 1, 0
        %v1104 = vsel %vm912, 1, 0
        %v1105 = vsel %vm913, 1, 0
        %v1106 = vsel %vm914, 1, 0
        %v1107 = vsel %vm915, 1, 0
        %v1108 = vsel %vm916, 1, 0
        %v1109 = vsel %vm917, 1, 0
        %v1110 = vsel %vm918, 1, 0
        %v1111 = vsel %vm919, 1, 0
        %v1112 = vsel %vm920, 1, 0
        %v1113 = vsel %vm921, 1, 0
        %v1114 = vsel %vm922, 1, 0
        %v1115 = vsel %vm923, 1, 0
        %v1116 = vsel %vm924, 1, 0
        %v1117 = vsel %vm925, 1, 0
        %v1118 = vsel %vm926, 1, 0
        %v1119 = vsel %vm927, 1, 0
        %v1120 = vsel %vm928, 1, 0
        %v1121 = vsel %vm929, 1, 0
        %v1122 = vsel %vm930, 1, 0
        %v1123 = vsel %vm931, 1, 0
        %v1124 = vsel %vm932, 1, 0
        %v1125 = vsel %vm933, 1, 0
        %v1126 = vsel %vm934, 1, 0
        %v1127 = vsel %vm935, 1, 0
        %v1128 = vsel %vm936, 1, 0
        %v1129 = vsel %vm937, 1, 0
        %v1130 = vsel %vm938, 1, 0
        %v1131 = vsel %vm939, 1, 0
        %v1132 = vsel %vm940, 1, 0
        %v1133 = vsel %vm941, 1, 0
        %v1134 = vsel %vm942, 1, 0
        %v1135 = vsel %vm943, 1, 0
        %v1136 = vsel %vm944, 1, 0
        %v1137 = vsel %vm945, 1, 0
        %v1138 = vsel %vm946, 1, 0
        %v1139 = vsel %vm947, 1, 0
        %v1140 = vsel %vm948, 1, 0
        %v1141 = vsel %vm949, 1, 0
        %v1142 = vsel %vm950, 1, 0
        %v1143 = vsel %vm951, 1, 0
        %v1144 = vsel %vm952, 1, 0
        %v1145 = vsel %vm953, 1, 0
        %v1146 = vsel %vm954, 1, 0
        %v1147 = vsel %vm955, 1, 0
        %v1148 = vsel %vm956, 1, 0
        %v1149 = vsel %vm957, 1, 0
        %v1150 = vsel %vm958, 1, 0
        %v1151 = vsel %vm959, 1, 0
        %v1152 = vsel %vm960, 1, 0
        %v1153 = vcvt.s32.f32 %v961
        %v1154 = vcvt.s32.f32 %v962
        %v1155 = vcvt.s32.f32 %v963
        %v1156 = vcvt.s32.f32 %v964
        %v1157 = vcvt.s32.f32 %v965
        %v1158 = vcvt.s32.f32 %v966
        %v1159 = vcvt.s32.f32 %v967
        %v1160 = vcvt.s32.f32 %v968
        %v1161 = vcvt.s32.f32 %v969
        %v1162 = vcvt.s32.f32 %v970
        %v1163 = vcvt.s32.f32 %v971
        %v1164 = vcvt.s32.f32 %v972
        %v1165 = vcvt.s32.f32 %v973
        %v1166 = vcvt.s32.f32 %v974
        %v1167 = vcvt.s32.f32 %v975
        %v1168 = vcvt.s32.f32 %v976
        %v1169 = vcvt.s32.f32 %v977
        %v1170 = vcvt.s32.f32 %v978
        %v1171 = vcvt.s32.f32 %v979
        %v1172 = vcvt.s32.f32 %v980
        %v1173 = vcvt.s32.f32 %v981
        %v1174 = vcvt.s32.f32 %v982
        %v1175 = vcvt.s32.f32 %v983
        %v1176 = vcvt.s32.f32 %v984
        %v1177 = vcvt.s32.f32 %v985
        %v1178 = vcvt.s32.f32 %v986
        %v1179 = vcvt.s32.f32 %v987
        %v1180 = vcvt.s32.f32 %v988
        %v1181 = vcvt.s32.f32 %v989
        %v1182 = vcvt.s32.f32 %v990
        %v1183 = vcvt.s32.f32 %v991
        %v1184 = vcvt.s32.f32 %v992
        %v1185 = vcvt.s32.f32 %v993
        %v1186 = vcvt.s32.f32 %v994
        %v1187 = vcvt.s32.f32 %v995
        %v1188 = vcvt.s32.f32 %v996
        %v1189 = vcvt.s32.f32 %v997
        %v1190 = vcvt.s32.f32 %v998
        %v1191 = vcvt.s32.f32 %v999
        %v1192 = vcvt.s32.f32 %v1000
        %v1193 = vcvt.s32.f32 %v1001
        %v1194 = vcvt.s32.f32 %v1002
        %v1195 = vcvt.s32.f32 %v1003
        %v1196 = vcvt.s32.f32 %v1004
        %v1197 = vcvt.s32.f32 %v1005
        %v1198 = vcvt.s32.f32 %v1006
        %v1199 = vcvt.s32.f32 %v1007
        %v1200 = vcvt.s32.f32 %v1008
        %v1201 = vcvt.s32.f32 %v1009
        %v1202 = vcvt.s32.f32 %v1010
        %v1203 = vcvt.s32.f32 %v1011
        %v1204 = vcvt.s32.f32 %v1012
        %v1205 = vcvt.s32.f32 %v1013
        %v1206 = vcvt.s32.f32 %v1014
        %v1207 = vcvt.s32.f32 %v1015
        %v1208 = vcvt.s32.f32 %v1016
        %v1209 = vcvt.s32.f32 %v1017
        %v1210 = vcvt.s32.f32 %v1018
        %v1211 = vcvt.s32.f32 %v1019
        %v1212 = vcvt.s32.f32 %v1020
        %v1213 = vcvt.s32.f32 %v1021
        %v1214 = vcvt.s32.f32 %v1022
        %v1215 = vcvt.s32.f32 %v1023
        %v1216 = vcvt.s32.f32 %v1024
        %v1217 = vcvt.s32.f32 %v1025
        %v1218 = vcvt.s32.f32 %v1026
        %v1219 = vcvt.s32.f32 %v1027
        %v1220 = vcvt.s32.f32 %v1028
        %v1221 = vcvt.s32.f32 %v1029
        %v1222 = vcvt.s32.f32 %v1030
        %v1223 = vcvt.s32.f32 %v1031
        %v1224 = vcvt.s32.f32 %v1032
        %v1225 = vcvt.s32.f32 %v1033
        %v1226 = vcvt.s32.f32 %v1034
        %v1227 = vcvt.s32.f32 %v1035
        %v1228 = vcvt.s32.f32 %v1036
        %v1229 = vcvt.s32.f32 %v1037
        %v1230 = vcvt.s32.f32 %v1038
        %v1231 = vcvt.s32.f32 %v1039
        %v1232 = vcvt.s32.f32 %v1040
        %v1233 = vcvt.s32.f32 %v1041
        %v1234 = vcvt.s32.f32 %v1042
        %v1235 = vcvt.s32.f32 %v1043
        %v1236 = vcvt.s32.f32 %v1044
        %v1237 = vcvt.s32.f32 %v1045
        %v1238 = vcvt.s32.f32 %v1046
        %v1239 = vcvt.s32.f32 %v1047
        %v1240 = vcvt.s32.f32 %v1048
        %v1241 = vcvt.s32.f32 %v1049
        %v1242 = vcvt.s32.f32 %v1050
        %v1243 = vcvt.s32.f32 %v1051
        %v1244 = vcvt.s32.f32 %v1052
        %v1245 = vcvt.s32.f32 %v1053
        %v1246 = vcvt.s32.f32 %v1054
        %v1247 = vcvt.s32.f32 %v1055
        %v1248 = vcvt.s32.f32 %v1056
        %v1249 = vcvt.s32.f32 %v1057
        %v1250 = vcvt.s32.f32 %v1058
        %v1251 = vcvt.s32.f32 %v1059
        %v1252 = vcvt.s32.f32 %v1060
        %v1253 = vcvt.s32.f32 %v1061
        %v1254 = vcvt.s32.f32 %v1062
        %v1255 = vcvt.s32.f32 %v1063
        %v1256 = vcvt.s32.f32 %v1064
        %v1257 = vcvt.s32.f32 %v1065
        %v1258 = vcvt.s32.f32 %v1066
        %v1259 = vcvt.s32.f32 %v1067
        %v1260 = vcvt.s32.f32 %v1068
        %v1261 = vcvt.s32.f32 %v1069
        %v1262 = vcvt.s32.f32 %v1070
        %v1263 = vcvt.s32.f32 %v1071
        %v1264 = vcvt.s32.f32 %v1072
        %v1265 = vcvt.s32.f32 %v1073
        %v1266 = vcvt.s32.f32 %v1074
        %v1267 = vcvt.s32.f32 %v1075
        %v1268 = vcvt.s32.f32 %v1076
        %v1269 = vcvt.s32.f32 %v1077
        %v1270 = vcvt.s32.f32 %v1078
        %v1271 = vcvt.s32.f32 %v1079
        %v1272 = vcvt.s32.f32 %v1080
        %v1273 = vcvt.s32.f32 %v1081
        %v1274 = vcvt.s32.f32 %v1082
        %v1275 = vcvt.s32.f32 %v1083
        %v1276 = vcvt.s32.f32 %v1084
        %v1277 = vcvt.s32.f32 %v1085
        %v1278 = vcvt.s32.f32 %v1086
        %v1279 = vcvt.s32.f32 %v1087
        %v1280 = vcvt.s32.f32 %v1088
        %v1281 = vcvt.s32.f32 %v1089
        %v1282 = vcvt.s32.f32 %v1090
        %v1283 = vcvt.s32.f32 %v1091
        %v1284 = vcvt.s32.f32 %v1092
        %v1285 = vcvt.s32.f32 %v1093
        %v1286 = vcvt.s32.f32 %v1094
        %v1287 = vcvt.s32.f32 %v1095
        %v1288 = vcvt.s32.f32 %v1096
        %v1289 = vcvt.s32.f32 %v1097
        %v1290 = vcvt.s32.f32 %v1098
        %v1291 = vcvt.s32.f32 %v1099
        %v1292 = vcvt.s32.f32 %v1100
        %v1293 = vcvt.s32.f32 %v1101
        %v1294 = vcvt.s32.f32 %v1102
        %v1295 = vcvt.s32.f32 %v1103
        %v1296 = vcvt.s32.f32 %v1104
        %v1297 = vcvt.s32.f32 %v1105
        %v1298 = vcvt.s32.f32 %v1106
        %v1299 = vcvt.s32.f32 %v1107
        %v1300 = vcvt.s32.f32 %v1108
        %v1301 = vcvt.s32.f32 %v1109
        %v1302 = vcvt.s32.f32 %v1110
        %v1303 = vcvt.s32.f32 %v1111
        %v1304 = vcvt.s32.f32 %v1112
        %v1305 = vcvt.s32.f32 %v1113
        %v1306 = vcvt.s32.f32 %v1114
        %v1307 = vcvt.s32.f32 %v1115
        %v1308 = vcvt.s32.f32 %v1116
        %v1309 = vcvt.s32.f32 %v1117
        %v1310 = vcvt.s32.f32 %v1118
        %v1311 = vcvt.s32.f32 %v1119
        %v1312 = vcvt.s32.f32 %v1120
        %v1313 = vcvt.s32.f32 %v1121
        %v1314 = vcvt.s32.f32 %v1122
        %v1315 = vcvt.s32.f32 %v1123
        %v1316 = vcvt.s32.f32 %v1124
        %v1317 = vcvt.s32.f32 %v1125
        %v1318 = vcvt.s32.f32 %v1126
        %v1319 = vcvt.s32.f32 %v1127
        %v1320 = vcvt.s32.f32 %v1128
        %v1321 = vcvt.s32.f32 %v1129
        %v1322 = vcvt.s32.f32 %v1130
        %v1323 = vcvt.s32.f32 %v1131
        %v1324 = vcvt.s32.f32 %v1132
        %v1325 = vcvt.s32.f32 %v1133
        %v1326 = vcvt.s32.f32 %v1134
        %v1327 = vcvt.s32.f32 %v1135
        %v1328 = vcvt.s32.f32 %v1136
        %v1329 = vcvt.s32.f32 %v1137
        %v1330 = vcvt.s32.f32 %v1138
        %v1331 = vcvt.s32.f32 %v1139
        %v1332 = vcvt.s32.f32 %v1140
        %v1333 = vcvt.s32.f32 %v1141
        %v1334 = vcvt.s32.f32 %v1142
        %v1335 = vcvt.s32.f32 %v1143
        %v1336 = vcvt.s32.f32 %v1144
        %v1337 = vcvt.s32.f32 %v1145
        %v1338 = vcvt.s32.f32 %v1146
        %v1339 = vcvt.s32.f32 %v1147
        %v1340 = vcvt.s32.f32 %v1148
        %v1341 = vcvt.s32.f32 %v1149
        %v1342 = vcvt.s32.f32 %v1150
        %v1343 = vcvt.s32.f32 %v1151
        %v1344 = vcvt.s32.f32 %v1152
        %v1345 = vld [vmem:[#allocation2] sm:$0xff]
        %v1346 = vld [vmem:[#allocation2 + $0x8] sm:$0xff]
        %v1347 = vld [vmem:[#allocation2 + $0x10] sm:$0xff]
        %v1348 = vld [vmem:[#allocation2 + $0x18] sm:$0xff]
        %v1349 = vld [vmem:[#allocation2 + $0x20] sm:$0xff]
        %v1350 = vld [vmem:[#allocation2 + $0x28] sm:$0xff]
        %v1351 = vld [vmem:[#allocation2 + $0x30] sm:$0xff]
        %v1352 = vld [vmem:[#allocation2 + $0x38] sm:$0xff]
        %v1353 = vld [vmem:[#allocation2 + $0x40] sm:$0xff]
        %v1354 = vld [vmem:[#allocation2 + $0x48] sm:$0xff]
        %v1355 = vld [vmem:[#allocation2 + $0x50] sm:$0xff]
        %v1356 = vld [vmem:[#allocation2 + $0x58] sm:$0xff]
        %v1357 = vld [vmem:[#allocation2 + $0x60] sm:$0xff]
        %v1358 = vld [vmem:[#allocation2 + $0x68] sm:$0xff]
        %v1359 = vld [vmem:[#allocation2 + $0x70] sm:$0xff]
        %v1360 = vld [vmem:[#allocation2 + $0x78] sm:$0xff]
        %v1361 = vld [vmem:[#allocation2 + $0x80] sm:$0xff]
        %v1362 = vld [vmem:[#allocation2 + $0x88] sm:$0xff]
        %v1363 = vld [vmem:[#allocation2 + $0x90] sm:$0xff]
        %v1364 = vld [vmem:[#allocation2 + $0x98] sm:$0xff]
        %v1365 = vld [vmem:[#allocation2 + $0xa0] sm:$0xff]
        %v1366 = vld [vmem:[#allocation2 + $0xa8] sm:$0xff]
        %v1367 = vld [vmem:[#allocation2 + $0xb0] sm:$0xff]
        %v1368 = vld [vmem:[#allocation2 + $0xb8] sm:$0xff]
        %v1369 = vld [vmem:[#allocation2 + $0xc0] sm:$0xff]
        %v1370 = vld [vmem:[#allocation2 + $0xc8] sm:$0xff]
        %v1371 = vld [vmem:[#allocation2 + $0xd0] sm:$0xff]
        %v1372 = vld [vmem:[#allocation2 + $0xd8] sm:$0xff]
        %v1373 = vld [vmem:[#allocation2 + $0xe0] sm:$0xff]
        %v1374 = vld [vmem:[#allocation2 + $0xe8] sm:$0xff]
        %v1375 = vld [vmem:[#allocation2 + $0xf0] sm:$0xff]
        %v1376 = vld [vmem:[#allocation2 + $0xf8] sm:$0xff]
        %v1377 = vld [vmem:[#allocation2 + $0x100] sm:$0xff]
        %v1378 = vld [vmem:[#allocation2 + $0x108] sm:$0xff]
        %v1379 = vld [vmem:[#allocation2 + $0x110] sm:$0xff]
        %v1380 = vld [vmem:[#allocation2 + $0x118] sm:$0xff]
        %v1381 = vld [vmem:[#allocation2 + $0x120] sm:$0xff]
        %v1382 = vld [vmem:[#allocation2 + $0x128] sm:$0xff]
        %v1383 = vld [vmem:[#allocation2 + $0x130] sm:$0xff]
        %v1384 = vld [vmem:[#allocation2 + $0x138] sm:$0xff]
        %v1385 = vld [vmem:[#allocation2 + $0x140] sm:$0xff]
        %v1386 = vld [vmem:[#allocation2 + $0x148] sm:$0xff]
        %v1387 = vld [vmem:[#allocation2 + $0x150] sm:$0xff]
        %v1388 = vld [vmem:[#allocation2 + $0x158] sm:$0xff]
        %v1389 = vld [vmem:[#allocation2 + $0x160] sm:$0xff]
        %v1390 = vld [vmem:[#allocation2 + $0x168] sm:$0xff]
        %v1391 = vld [vmem:[#allocation2 + $0x170] sm:$0xff]
        %v1392 = vld [vmem:[#allocation2 + $0x178] sm:$0xff]
        %1393 = vmatprep.subr.mxu0 0.0
        %1394 = vmatpush1.msra.mxu0 %v1345
        %1395 = vmatprep.subr.mxu0 0.0
        %1396 = vmatpush1.msra.mxu0 %v1346
        %1397 = vmatprep.subr.mxu0 0.0
        %1398 = vmatpush1.msra.mxu0 %v1347
        %1399 = vmatprep.subr.mxu0 0.0
        %1400 = vmatpush1.msra.mxu0 %v1348
        %1401 = vmatprep.subr.mxu0 0.0
        %1402 = vmatpush1.msra.mxu0 %v1349
        %1403 = vmatprep.subr.mxu0 0.0
        %1404 = vmatpush1.msra.mxu0 %v1350
        %1405 = vmatprep.subr.mxu0 0.0
        %1406 = vmatpush1.msra.mxu0 %v1351
        %1407 = vmatprep.subr.mxu0 0.0
        %1408 = vmatpush1.msra.mxu0 %v1352
        %1409 = vmatprep.subr.mxu0 0.0
        %1410 = vmatpush1.msra.mxu0 %v1353
        %1411 = vmatprep.subr.mxu0 0.0
        %1412 = vmatpush1.msra.mxu0 %v1354
        %1413 = vmatprep.subr.mxu0 0.0
        %1414 = vmatpush1.msra.mxu0 %v1355
        %1415 = vmatprep.subr.mxu0 0.0
        %1416 = vmatpush1.msra.mxu0 %v1356
        %1417 = vmatprep.subr.mxu0 0.0
        %1418 = vmatpush1.msra.mxu0 %v1357
        %1419 = vmatprep.subr.mxu0 0.0
        %1420 = vmatpush1.msra.mxu0 %v1358
        %1421 = vmatprep.subr.mxu0 0.0
        %1422 = vmatpush1.msra.mxu0 %v1359
        %1423 = vmatprep.subr.mxu0 0.0
        %1424 = vmatpush1.msra.mxu0 %v1360
        %1425 = vmatprep.subr.mxu0 0.0
        %1426 = vmatpush1.msra.mxu0 %v1361
        %1427 = vmatprep.subr.mxu0 0.0
        %1428 = vmatpush1.msra.mxu0 %v1362
        %1429 = vmatprep.subr.mxu0 0.0
        %1430 = vmatpush1.msra.mxu0 %v1363
        %1431 = vmatprep.subr.mxu0 0.0
        %1432 = vmatpush1.msra.mxu0 %v1364
        %1433 = vmatprep.subr.mxu0 0.0
        %1434 = vmatpush1.msra.mxu0 %v1365
        %1435 = vmatprep.subr.mxu0 0.0
        %1436 = vmatpush1.msra.mxu0 %v1366
        %1437 = vmatprep.subr.mxu0 0.0
        %1438 = vmatpush1.msra.mxu0 %v1367
        %1439 = vmatprep.subr.mxu0 0.0
        %1440 = vmatpush1.msra.mxu0 %v1368
        %1441 = vmatprep.subr.mxu0 0.0
        %1442 = vmatpush1.msra.mxu0 %v1369
        %1443 = vmatprep.subr.mxu0 0.0
        %1444 = vmatpush1.msra.mxu0 %v1370
        %1445 = vmatprep.subr.mxu0 0.0
        %1446 = vmatpush1.msra.mxu0 %v1371
        %1447 = vmatprep.subr.mxu0 0.0
        %1448 = vmatpush1.msra.mxu0 %v1372
        %1449 = vmatprep.subr.mxu0 0.0
        %1450 = vmatpush1.msra.mxu0 %v1373
        %1451 = vmatprep.subr.mxu0 0.0
        %1452 = vmatpush1.msra.mxu0 %v1374
        %1453 = vmatprep.subr.mxu0 0.0
        %1454 = vmatpush1.msra.mxu0 %v1375
        %1455 = vmatprep.subr.mxu0 0.0
        %1456 = vmatpush1.msra.mxu0 %v1376
        %1457 = vmatprep.mubr.f32.mxu0 %v1154
        %1458 = vmatmul.mubr.f32.gmra.mrb[0].mxu0 %v1153
        %v1459 = vpop.f32.mrb[0].mxu0
        %v1460 = vadd.f32 0.0, %v1459
        %v1461 = vpop.f32.mrb[0].mxu0
        %1462 = vmatprep.mubr.f32.mxu0 %v1157
        %1463 = vmatmul.mubr.f32.gmra.mrb[0].mxu0 %v1156
        %v1464 = vpop.f32.mrb[0].mxu0
        %v1465 = vadd.f32 0.0, %v1464
        %v1466 = vpop.f32.mrb[0].mxu0
        %1467 = vmatprep.mubr.f32.mxu0 %v1160
        %1468 = vmatmul.mubr.f32.gmra.mrb[0].mxu0 %v1159
        %v1469 = vpop.f32.mrb[0].mxu0
        %v1470 = vadd.f32 0.0, %v1469
        %v1471 = vpop.f32.mrb[0].mxu0
        %1472 = vmatprep.mubr.f32.mxu0 %v1163
        %1473 = vmatmul.mubr.f32.gmra.mrb[0].mxu0 %v1162
        %v1474 = vpop.f32.mrb[0].mxu0
        %v1475 = vadd.f32 0.0, %v1474
        %v1476 = vpop.f32.mrb[0].mxu0
        %1477 = vmatprep.mubr.f32.mxu0 %v1166
        %1478 = vmatmul.mubr.f32.gmra.mrb[0].mxu0 %v1165
        %v1479 = vpop.f32.mrb[0].mxu0
        %v1480 = vadd.f32 0.0, %v1479
        %v1481 = vpop.f32.mrb[0].mxu0
        %1482 = vmatprep.mubr.f32.mxu0 %v1169
        %1483 = vmatmul.mubr.f32.gmra.mrb[0].mxu0 %v1168
        %v1484 = vpop.f32.mrb[0].mxu0
        %v1485 = vadd.f32 0.0, %v1484
        %v1486 = vpop.f32.mrb[0].mxu0
        %1487 = vmatprep.mubr.f32.mxu0 %v1172
        %1488 = vmatmul.mubr.f32.gmra.mrb[0].mxu0 %v1171
        %v1489 = vpop.f32.mrb[0].mxu0
        %v1490 = vadd.f32 0.0, %v1489
        %v1491 = vpop.f32.mrb[0].mxu0
        %1492 = vmatprep.mubr.f32.mxu0 %v1175
        %1493 = vmatmul.mubr.f32.gmra.mrb[0].mxu0 %v1174
        %v1494 = vpop.f32.mrb[0].mxu0
        %v1495 = vadd.f32 0.0, %v1494
        %v1496 = vpop.f32.mrb[0].mxu0
        %1497 = vmatprep.mubr.f32.mxu0 %v1178
        %1498 = vmatmul.mubr.f32.gmra.mrb[0].mxu0 %v1177
        %v1499 = vpop.f32.mrb[0].mxu0
        %v1500 = vadd.f32 0.0, %v1499
        %v1501 = vpop.f32.mrb[0].mxu0
        %1502 = vmatprep.mubr.f32.mxu0 %v1181
        %1503 = vmatmul.mubr.f32.gmra.mrb[0].mxu0 %v1180
        %v1504 = vpop.f32.mrb[0].mxu0
        %v1505 = vadd.f32 0.0, %v1504
        %v1506 = vpop.f32.mrb[0].mxu0
        %1507 = vmatprep.mubr.f32.mxu0 %v1184
        %1508 = vmatmul.mubr.f32.gmra.mrb[0].mxu0 %v1183
        %v1509 = vpop.f32.mrb[0].mxu0
        %v1510 = vadd.f32 0.0, %v1509
        %v1511 = vpop.f32.mrb[0].mxu0
        %1512 = vmatprep.mubr.f32.mxu0 %v1187
        %1513 = vmatmul.mubr.f32.gmra.mrb[0].mxu0 %v1186
        %v1514 = vpop.f32.mrb[0].mxu0
        %v1515 = vadd.f32 0.0, %v1514
        %v1516 = vpop.f32.mrb[0].mxu0
        %1517 = vmatprep.mubr.f32.mxu0 %v1190
        %1518 = vmatmul.mubr.f32.gmra.mrb[0].mxu0 %v1189
        %v1519 = vpop.f32.mrb[0].mxu0
        %v1520 = vadd.f32 0.0, %v1519
        %v1521 = vpop.f32.mrb[0].mxu0
        %1522 = vmatprep.mubr.f32.mxu0 %v1193
        %1523 = vmatmul.mubr.f32.gmra.mrb[0].mxu0 %v1192
        %v1524 = vpop.f32.mrb[0].mxu0
        %v1525 = vadd.f32 0.0, %v1524
        %v1526 = vpop.f32.mrb[0].mxu0
        %1527 = vmatprep.mubr.f32.mxu0 %v1196
        %1528 = vmatmul.mubr.f32.gmra.mrb[0].mxu0 %v1195
        %v1529 = vpop.f32.mrb[0].mxu0
        %v1530 = vadd.f32 0.0, %v1529
        %v1531 = vpop.f32.mrb[0].mxu0
        %1532 = vmatprep.mubr.f32.mxu0 %v1199
        %1533 = vmatmul.mubr.f32.gmra.mrb[0].mxu0 %v1198
        %v1534 = vpop.f32.mrb[0].mxu0
        %v1535 = vadd.f32 0.0, %v1534
        %v1536 = vpop.f32.mrb[0].mxu0
        %1537 = vmatprep.mubr.f32.mxu0 %v1202
        %1538 = vmatmul.mubr.f32.gmra.mrb[0].mxu0 %v1201
        %v1539 = vpop.f32.mrb[0].mxu0
        %v1540 = vadd.f32 0.0, %v1539
        %v1541 = vpop.f32.mrb[0].mxu0
        %1542 = vmatprep.mubr.f32.mxu0 %v1205
        %1543 = vmatmul.mubr.f32.gmra.mrb[0].mxu0 %v1204
        %v1544 = vpop.f32.mrb[0].mxu0
        %v1545 = vadd.f32 0.0, %v1544
        %v1546 = vpop.f32.mrb[0].mxu0
        %1547 = vmatprep.mubr.f32.mxu0 %v1208
        %1548 = vmatmul.mubr.f32.gmra.mrb[0].mxu0 %v1207
        %v1549 = vpop.f32.mrb[0].mxu0
        %v1550 = vadd.f32 0.0, %v1549
        %v1551 = vpop.f32.mrb[0].mxu0
        %1552 = vmatprep.mubr.f32.mxu0 %v1211
        %1553 = vmatmul.mubr.f32.gmra.mrb[0].mxu0 %v1210
        %v1554 = vpop.f32.mrb[0].mxu0
        %v1555 = vadd.f32 0.0, %v1554
        %v1556 = vpop.f32.mrb[0].mxu0
        %1557 = vmatprep.mubr.f32.mxu0 %v1214
        %1558 = vmatmul.mubr.f32.gmra.mrb[0].mxu0 %v1213
        %v1559 = vpop.f32.mrb[0].mxu0
        %v1560 = vadd.f32 0.0, %v1559
        %v1561 = vpop.f32.mrb[0].mxu0
        %1562 = vmatprep.mubr.f32.mxu0 %v1217
        %1563 = vmatmul.mubr.f32.gmra.mrb[0].mxu0 %v1216
        %v1564 = vpop.f32.mrb[0].mxu0
        %v1565 = vadd.f32 0.0, %v1564
        %v1566 = vpop.f32.mrb[0].mxu0
        %1567 = vmatprep.mubr.f32.mxu0 %v1220
        %1568 = vmatmul.mubr.f32.gmra.mrb[0].mxu0 %v1219
        %v1569 = vpop.f32.mrb[0].mxu0
        %v1570 = vadd.f32 0.0, %v1569
        %v1571 = vpop.f32.mrb[0].mxu0
        %1572 = vmatprep.mubr.f32.mxu0 %v1223
        %1573 = vmatmul.mubr.f32.gmra.mrb[0].mxu0 %v1222
        %v1574 = vpop.f32.mrb[0].mxu0
        %v1575 = vadd.f32 0.0, %v1574
        %v1576 = vpop.f32.mrb[0].mxu0
        %1577 = vmatprep.mubr.f32.mxu0 %v1226
        %1578 = vmatmul.mubr.f32.gmra.mrb[0].mxu0 %v1225
        %v1579 = vpop.f32.mrb[0].mxu0
        %v1580 = vadd.f32 0.0, %v1579
        %v1581 = vpop.f32.mrb[0].mxu0
        %1582 = vmatprep.mubr.f32.mxu0 %v1229
        %1583 = vmatmul.mubr.f32.gmra.mrb[0].mxu0 %v1228
        %v1584 = vpop.f32.mrb[0].mxu0
        %v1585 = vadd.f32 0.0, %v1584
        %v1586 = vpop.f32.mrb[0].mxu0
        %1587 = vmatprep.mubr.f32.mxu0 %v1232
        %1588 = vmatmul.mubr.f32.gmra.mrb[0].mxu0 %v1231
        %v1589 = vpop.f32.mrb[0].mxu0
        %v1590 = vadd.f32 0.0, %v1589
        %v1591 = vpop.f32.mrb[0].mxu0
        %1592 = vmatprep.mubr.f32.mxu0 %v1235
        %1593 = vmatmul.mubr.f32.gmra.mrb[0].mxu0 %v1234
        %v1594 = vpop.f32.mrb[0].mxu0
        %v1595 = vadd.f32 0.0, %v1594
        %v1596 = vpop.f32.mrb[0].mxu0
        %1597 = vmatprep.mubr.f32.mxu0 %v1238
        %1598 = vmatmul.mubr.f32.gmra.mrb[0].mxu0 %v1237
        %v1599 = vpop.f32.mrb[0].mxu0
        %v1600 = vadd.f32 0.0, %v1599
        %v1601 = vpop.f32.mrb[0].mxu0
        %1602 = vmatprep.mubr.f32.mxu0 %v1241
        %1603 = vmatmul.mubr.f32.gmra.mrb[0].mxu0 %v1240
        %v1604 = vpop.f32.mrb[0].mxu0
        %v1605 = vadd.f32 0.0, %v1604
        %v1606 = vpop.f32.mrb[0].mxu0
        %1607 = vmatprep.mubr.f32.mxu0 %v1244
        %1608 = vmatmul.mubr.f32.gmra.mrb[0].mxu0 %v1243
        %v1609 = vpop.f32.mrb[0].mxu0
        %v1610 = vadd.f32 0.0, %v1609
        %v1611 = vpop.f32.mrb[0].mxu0
        %1612 = vmatprep.mubr.f32.mxu0 %v1247
        %1613 = vmatmul.mubr.f32.gmra.mrb[0].mxu0 %v1246
        %v1614 = vpop.f32.mrb[0].mxu0
        %v1615 = vadd.f32 0.0, %v1614
        %v1616 = vpop.f32.mrb[0].mxu0
        %1617 = vmatprep.mubr.f32.mxu0 %v1250
        %1618 = vmatmul.mubr.f32.gmra.mrb[0].mxu0 %v1249
        %v1619 = vpop.f32.mrb[0].mxu0
        %v1620 = vadd.f32 0.0, %v1619
        %v1621 = vpop.f32.mrb[0].mxu0
        %1622 = vmatprep.mubr.f32.mxu0 %v1253
        %1623 = vmatmul.mubr.f32.gmra.mrb[0].mxu0 %v1252
        %v1624 = vpop.f32.mrb[0].mxu0
        %v1625 = vadd.f32 0.0, %v1624
        %v1626 = vpop.f32.mrb[0].mxu0
        %1627 = vmatprep.mubr.f32.mxu0 %v1256
        %1628 = vmatmul.mubr.f32.gmra.mrb[0].mxu0 %v1255
        %v1629 = vpop.f32.mrb[0].mxu0
        %v1630 = vadd.f32 0.0, %v1629
        %v1631 = vpop.f32.mrb[0].mxu0
        %1632 = vmatprep.mubr.f32.mxu0 %v1259
        %1633 = vmatmul.mubr.f32.gmra.mrb[0].mxu0 %v1258
        %v1634 = vpop.f32.mrb[0].mxu0
        %v1635 = vadd.f32 0.0, %v1634
        %v1636 = vpop.f32.mrb[0].mxu0
        %1637 = vmatprep.mubr.f32.mxu0 %v1262
        %1638 = vmatmul.mubr.f32.gmra.mrb[0].mxu0 %v1261
        %v1639 = vpop.f32.mrb[0].mxu0
        %v1640 = vadd.f32 0.0, %v1639
        %v1641 = vpop.f32.mrb[0].mxu0
        %1642 = vmatprep.mubr.f32.mxu0 %v1265
        %1643 = vmatmul.mubr.f32.gmra.mrb[0].mxu0 %v1264
        %v1644 = vpop.f32.mrb[0].mxu0
        %v1645 = vadd.f32 0.0, %v1644
        %v1646 = vpop.f32.mrb[0].mxu0
        %1647 = vmatprep.mubr.f32.mxu0 %v1268
        %1648 = vmatmul.mubr.f32.gmra.mrb[0].mxu0 %v1267
        %v1649 = vpop.f32.mrb[0].mxu0
        %v1650 = vadd.f32 0.0, %v1649
        %v1651 = vpop.f32.mrb[0].mxu0
        %1652 = vmatprep.mubr.f32.mxu0 %v1271
        %1653 = vmatmul.mubr.f32.gmra.mrb[0].mxu0 %v1270
        %v1654 = vpop.f32.mrb[0].mxu0
        %v1655 = vadd.f32 0.0, %v1654
        %v1656 = vpop.f32.mrb[0].mxu0
        %1657 = vmatprep.mubr.f32.mxu0 %v1274
        %1658 = vmatmul.mubr.f32.gmra.mrb[0].mxu0 %v1273
        %v1659 = vpop.f32.mrb[0].mxu0
        %v1660 = vadd.f32 0.0, %v1659
        %v1661 = vpop.f32.mrb[0].mxu0
        %1662 = vmatprep.mubr.f32.mxu0 %v1277
        %1663 = vmatmul.mubr.f32.gmra.mrb[0].mxu0 %v1276
        %v1664 = vpop.f32.mrb[0].mxu0
        %v1665 = vadd.f32 0.0, %v1664
        %v1666 = vpop.f32.mrb[0].mxu0
        %1667 = vmatprep.mubr.f32.mxu0 %v1280
        %1668 = vmatmul.mubr.f32.gmra.mrb[0].mxu0 %v1279
        %v1669 = vpop.f32.mrb[0].mxu0
        %v1670 = vadd.f32 0.0, %v1669
        %v1671 = vpop.f32.mrb[0].mxu0
        %1672 = vmatprep.mubr.f32.mxu0 %v1283
        %1673 = vmatmul.mubr.f32.gmra.mrb[0].mxu0 %v1282
        %v1674 = vpop.f32.mrb[0].mxu0
        %v1675 = vadd.f32 0.0, %v1674
        %v1676 = vpop.f32.mrb[0].mxu0
        %1677 = vmatprep.mubr.f32.mxu0 %v1286
        %1678 = vmatmul.mubr.f32.gmra.mrb[0].mxu0 %v1285
        %v1679 = vpop.f32.mrb[0].mxu0
        %v1680 = vadd.f32 0.0, %v1679
        %v1681 = vpop.f32.mrb[0].mxu0
        %1682 = vmatprep.mubr.f32.mxu0 %v1289
        %1683 = vmatmul.mubr.f32.gmra.mrb[0].mxu0 %v1288
        %v1684 = vpop.f32.mrb[0].mxu0
        %v1685 = vadd.f32 0.0, %v1684
        %v1686 = vpop.f32.mrb[0].mxu0
        %1687 = vmatprep.mubr.f32.mxu0 %v1292
        %1688 = vmatmul.mubr.f32.gmra.mrb[0].mxu0 %v1291
        %v1689 = vpop.f32.mrb[0].mxu0
        %v1690 = vadd.f32 0.0, %v1689
        %v1691 = vpop.f32.mrb[0].mxu0
        %1692 = vmatprep.mubr.f32.mxu0 %v1295
        %1693 = vmatmul.mubr.f32.gmra.mrb[0].mxu0 %v1294
        %v1694 = vpop.f32.mrb[0].mxu0
        %v1695 = vadd.f32 0.0, %v1694
        %v1696 = vpop.f32.mrb[0].mxu0
        %1697 = vmatprep.mubr.f32.mxu0 %v1298
        %1698 = vmatmul.mubr.f32.gmra.mrb[0].mxu0 %v1297
        %v1699 = vpop.f32.mrb[0].mxu0
        %v1700 = vadd.f32 0.0, %v1699
        %v1701 = vpop.f32.mrb[0].mxu0
        %1702 = vmatprep.mubr.f32.mxu0 %v1301
        %1703 = vmatmul.mubr.f32.gmra.mrb[0].mxu0 %v1300
        %v1704 = vpop.f32.mrb[0].mxu0
        %v1705 = vadd.f32 0.0, %v1704
        %v1706 = vpop.f32.mrb[0].mxu0
        %1707 = vmatprep.mubr.f32.mxu0 %v1304
        %1708 = vmatmul.mubr.f32.gmra.mrb[0].mxu0 %v1303
        %v1709 = vpop.f32.mrb[0].mxu0
        %v1710 = vadd.f32 0.0, %v1709
        %v1711 = vpop.f32.mrb[0].mxu0
        %1712 = vmatprep.mubr.f32.mxu0 %v1307
        %1713 = vmatmul.mubr.f32.gmra.mrb[0].mxu0 %v1306
        %v1714 = vpop.f32.mrb[0].mxu0
        %v1715 = vadd.f32 0.0, %v1714
        %v1716 = vpop.f32.mrb[0].mxu0
        %1717 = vmatprep.mubr.f32.mxu0 %v1310
        %1718 = vmatmul.mubr.f32.gmra.mrb[0].mxu0 %v1309
        %v1719 = vpop.f32.mrb[0].mxu0
        %v1720 = vadd.f32 0.0, %v1719
        %v1721 = vpop.f32.mrb[0].mxu0
        %1722 = vmatprep.mubr.f32.mxu0 %v1313
        %1723 = vmatmul.mubr.f32.gmra.mrb[0].mxu0 %v1312
        %v1724 = vpop.f32.mrb[0].mxu0
        %v1725 = vadd.f32 0.0, %v1724
        %v1726 = vpop.f32.mrb[0].mxu0
        %1727 = vmatprep.mubr.f32.mxu0 %v1316
        %1728 = vmatmul.mubr.f32.gmra.mrb[0].mxu0 %v1315
        %v1729 = vpop.f32.mrb[0].mxu0
        %v1730 = vadd.f32 0.0, %v1729
        %v1731 = vpop.f32.mrb[0].mxu0
        %1732 = vmatprep.mubr.f32.mxu0 %v1319
        %1733 = vmatmul.mubr.f32.gmra.mrb[0].mxu0 %v1318
        %v1734 = vpop.f32.mrb[0].mxu0
        %v1735 = vadd.f32 0.0, %v1734
        %v1736 = vpop.f32.mrb[0].mxu0
        %1737 = vmatprep.mubr.f32.mxu0 %v1322
        %1738 = vmatmul.mubr.f32.gmra.mrb[0].mxu0 %v1321
        %v1739 = vpop.f32.mrb[0].mxu0
        %v1740 = vadd.f32 0.0, %v1739
        %v1741 = vpop.f32.mrb[0].mxu0
        %1742 = vmatprep.mubr.f32.mxu0 %v1325
        %1743 = vmatmul.mubr.f32.gmra.mrb[0].mxu0 %v1324
        %v1744 = vpop.f32.mrb[0].mxu0
        %v1745 = vadd.f32 0.0, %v1744
        %v1746 = vpop.f32.mrb[0].mxu0
        %1747 = vmatprep.mubr.f32.mxu0 %v1328
        %1748 = vmatmul.mubr.f32.gmra.mrb[0].mxu0 %v1327
        %v1749 = vpop.f32.mrb[0].mxu0
        %v1750 = vadd.f32 0.0, %v1749
        %v1751 = vpop.f32.mrb[0].mxu0
        %1752 = vmatprep.mubr.f32.mxu0 %v1331
        %1753 = vmatmul.mubr.f32.gmra.mrb[0].mxu0 %v1330
        %v1754 = vpop.f32.mrb[0].mxu0
        %v1755 = vadd.f32 0.0, %v1754
        %v1756 = vpop.f32.mrb[0].mxu0
        %1757 = vmatprep.mubr.f32.mxu0 %v1334
        %1758 = vmatmul.mubr.f32.gmra.mrb[0].mxu0 %v1333
        %v1759 = vpop.f32.mrb[0].mxu0
        %v1760 = vadd.f32 0.0, %v1759
        %v1761 = vpop.f32.mrb[0].mxu0
        %1762 = vmatprep.mubr.f32.mxu0 %v1337
        %1763 = vmatmul.mubr.f32.gmra.mrb[0].mxu0 %v1336
        %v1764 = vpop.f32.mrb[0].mxu0
        %v1765 = vadd.f32 0.0, %v1764
        %v1766 = vpop.f32.mrb[0].mxu0
        %1767 = vmatprep.mubr.f32.mxu0 %v1340
        %1768 = vmatmul.mubr.f32.gmra.mrb[0].mxu0 %v1339
        %v1769 = vpop.f32.mrb[0].mxu0
        %v1770 = vadd.f32 0.0, %v1769
        %v1771 = vpop.f32.mrb[0].mxu0
        %1772 = vmatprep.mubr.f32.mxu0 %v1343
        %1773 = vmatmul.mubr.f32.gmra.mrb[0].mxu0 %v1342
        %v1774 = vpop.f32.mrb[0].mxu0
        %v1775 = vadd.f32 0.0, %v1774
        %v1776 = vpop.f32.mrb[0].mxu0
        %1777 = vdwg.mxu0
        %1778 = vmatprep.subr.mxu0 0.0
        %1779 = vmatpush1.msra.mxu0 %v1377
        %1780 = vmatprep.subr.mxu0 0.0
        %1781 = vmatpush1.msra.mxu0 %v1378
        %1782 = vmatprep.subr.mxu0 0.0
        %1783 = vmatpush1.msra.mxu0 %v1379
        %1784 = vmatprep.subr.mxu0 0.0
        %1785 = vmatpush1.msra.mxu0 %v1380
        %1786 = vmatprep.subr.mxu0 0.0
        %1787 = vmatpush1.msra.mxu0 %v1381
        %1788 = vmatprep.subr.mxu0 0.0
        %1789 = vmatpush1.msra.mxu0 %v1382
        %1790 = vmatprep.subr.mxu0 0.0
        %1791 = vmatpush1.msra.mxu0 %v1383
        %1792 = vmatprep.subr.mxu0 0.0
        %1793 = vmatpush1.msra.mxu0 %v1384
        %1794 = vmatprep.subr.mxu0 0.0
        %1795 = vmatpush1.msra.mxu0 %v1385
        %1796 = vmatprep.subr.mxu0 0.0
        %1797 = vmatpush1.msra.mxu0 %v1386
        %1798 = vmatprep.subr.mxu0 0.0
        %1799 = vmatpush1.msra.mxu0 %v1387
        %1800 = vmatprep.subr.mxu0 0.0
        %1801 = vmatpush1.msra.mxu0 %v1388
        %1802 = vmatprep.subr.mxu0 0.0
        %1803 = vmatpush1.msra.mxu0 %v1389
        %1804 = vmatprep.subr.mxu0 0.0
        %1805 = vmatpush1.msra.mxu0 %v1390
        %1806 = vmatprep.subr.mxu0 0.0
        %1807 = vmatpush1.msra.mxu0 %v1391
        %1808 = vmatprep.subr.mxu0 0.0
        %1809 = vmatpush1.msra.mxu0 %v1392
        %1810 = vmatprep.subr.mxu0 0.0
        %1811 = vmatpush1.msra.mxu0 0.0
        %1812 = vmatprep.subr.mxu0 0.0
        %1813 = vmatpush1.msra.mxu0 0.0
        %1814 = vmatprep.subr.mxu0 0.0
        %1815 = vmatpush1.msra.mxu0 0.0
        %1816 = vmatprep.subr.mxu0 0.0
        %1817 = vmatpush1.msra.mxu0 0.0
        %1818 = vmatprep.subr.mxu0 0.0
        %1819 = vmatpush1.msra.mxu0 0.0
        %1820 = vmatprep.subr.mxu0 0.0
        %1821 = vmatpush1.msra.mxu0 0.0
        %1822 = vmatprep.subr.mxu0 0.0
        %1823 = vmatpush1.msra.mxu0 0.0
        %1824 = vmatprep.subr.mxu0 0.0
        %1825 = vmatpush1.msra.mxu0 0.0
        %1826 = vmatprep.subr.mxu0 0.0
        %1827 = vmatpush1.msra.mxu0 0.0
        %1828 = vmatprep.subr.mxu0 0.0
        %1829 = vmatpush1.msra.mxu0 0.0
        %1830 = vmatprep.subr.mxu0 0.0
        %1831 = vmatpush1.msra.mxu0 0.0
        %1832 = vmatprep.subr.mxu0 0.0
        %1833 = vmatpush1.msra.mxu0 0.0
        %1834 = vmatprep.subr.mxu0 0.0
        %1835 = vmatpush1.msra.mxu0 0.0
        %1836 = vmatprep.subr.mxu0 0.0
        %1837 = vmatpush1.msra.mxu0 0.0
        %1838 = vmatprep.subr.mxu0 0.0
        %1839 = vmatpush1.msra.mxu0 0.0
        %1840 = vmatprep.subr.mxu0 0.0
        %1841 = vmatpush1.msra.mxu0 0.0
        %1842 = vmatprep.mubr.f32.mxu0 0.0
        %1843 = vmatmul.mubr.f32.gmra.mrb[0].mxu0 %v1155
        %v1844 = vpop.f32.mrb[0].mxu0
        %v1845 = vadd.f32 %v1460, %v1844
        %v1846 = vpop.f32.mrb[0].mxu0
        %1847 = vmatprep.mubr.f32.mxu0 0.0
        %1848 = vmatmul.mubr.f32.gmra.mrb[0].mxu0 %v1158
        %v1849 = vpop.f32.mrb[0].mxu0
        %v1850 = vadd.f32 %v1465, %v1849
        %v1851 = vpop.f32.mrb[0].mxu0
        %1852 = vmatprep.mubr.f32.mxu0 0.0
        %1853 = vmatmul.mubr.f32.gmra.mrb[0].mxu0 %v1161
        %v1854 = vpop.f32.mrb[0].mxu0
        %v1855 = vadd.f32 %v1470, %v1854
        %v1856 = vpop.f32.mrb[0].mxu0
        %1857 = vmatprep.mubr.f32.mxu0 0.0
        %1858 = vmatmul.mubr.f32.gmra.mrb[0].mxu0 %v1164
        %v1859 = vpop.f32.mrb[0].mxu0
        %v1860 = vadd.f32 %v1475, %v1859
        %v1861 = vpop.f32.mrb[0].mxu0
        %1862 = vmatprep.mubr.f32.mxu0 0.0
        %1863 = vmatmul.mubr.f32.gmra.mrb[0].mxu0 %v1167
        %v1864 = vpop.f32.mrb[0].mxu0
        %v1865 = vadd.f32 %v1480, %v1864
        %v1866 = vpop.f32.mrb[0].mxu0
        %1867 = vmatprep.mubr.f32.mxu0 0.0
        %1868 = vmatmul.mubr.f32.gmra.mrb[0].mxu0 %v1170
        %v1869 = vpop.f32.mrb[0].mxu0
        %v1870 = vadd.f32 %v1485, %v1869
        %v1871 = vpop.f32.mrb[0].mxu0
        %1872 = vmatprep.mubr.f32.mxu0 0.0
        %1873 = vmatmul.mubr.f32.gmra.mrb[0].mxu0 %v1173
        %v1874 = vpop.f32.mrb[0].mxu0
        %v1875 = vadd.f32 %v1490, %v1874
        %v1876 = vpop.f32.mrb[0].mxu0
        %1877 = vmatprep.mubr.f32.mxu0 0.0
        %1878 = vmatmul.mubr.f32.gmra.mrb[0].mxu0 %v1176
        %v1879 = vpop.f32.mrb[0].mxu0
        %v1880 = vadd.f32 %v1495, %v1879
        %v1881 = vpop.f32.mrb[0].mxu0
        %1882 = vmatprep.mubr.f32.mxu0 0.0
        %1883 = vmatmul.mubr.f32.gmra.mrb[0].mxu0 %v1179
        %v1884 = vpop.f32.mrb[0].mxu0
        %v1885 = vadd.f32 %v1500, %v1884
        %v1886 = vpop.f32.mrb[0].mxu0
        %1887 = vmatprep.mubr.f32.mxu0 0.0
        %1888 = vmatmul.mubr.f32.gmra.mrb[0].mxu0 %v1182
        %v1889 = vpop.f32.mrb[0].mxu0
        %v1890 = vadd.f32 %v1505, %v1889
        %v1891 = vpop.f32.mrb[0].mxu0
        %1892 = vmatprep.mubr.f32.mxu0 0.0
        %1893 = vmatmul.mubr.f32.gmra.mrb[0].mxu0 %v1185
        %v1894 = vpop.f32.mrb[0].mxu0
        %v1895 = vadd.f32 %v1510, %v1894
        %v1896 = vpop.f32.mrb[0].mxu0
        %1897 = vmatprep.mubr.f32.mxu0 0.0
        %1898 = vmatmul.mubr.f32.gmra.mrb[0].mxu0 %v1188
        %v1899 = vpop.f32.mrb[0].mxu0
        %v1900 = vadd.f32 %v1515, %v1899
        %v1901 = vpop.f32.mrb[0].mxu0
        %1902 = vmatprep.mubr.f32.mxu0 0.0
        %1903 = vmatmul.mubr.f32.gmra.mrb[0].mxu0 %v1191
        %v1904 = vpop.f32.mrb[0].mxu0
        %v1905 = vadd.f32 %v1520, %v1904
        %v1906 = vpop.f32.mrb[0].mxu0
        %1907 = vmatprep.mubr.f32.mxu0 0.0
        %1908 = vmatmul.mubr.f32.gmra.mrb[0].mxu0 %v1194
        %v1909 = vpop.f32.mrb[0].mxu0
        %v1910 = vadd.f32 %v1525, %v1909
        %v1911 = vpop.f32.mrb[0].mxu0
        %1912 = vmatprep.mubr.f32.mxu0 0.0
        %1913 = vmatmul.mubr.f32.gmra.mrb[0].mxu0 %v1197
        %v1914 = vpop.f32.mrb[0].mxu0
        %v1915 = vadd.f32 %v1530, %v1914
        %v1916 = vpop.f32.mrb[0].mxu0
        %1917 = vmatprep.mubr.f32.mxu0 0.0
        %1918 = vmatmul.mubr.f32.gmra.mrb[0].mxu0 %v1200
        %v1919 = vpop.f32.mrb[0].mxu0
        %v1920 = vadd.f32 %v1535, %v1919
        %v1921 = vpop.f32.mrb[0].mxu0
        %1922 = vmatprep.mubr.f32.mxu0 0.0
        %1923 = vmatmul.mubr.f32.gmra.mrb[0].mxu0 %v1203
        %v1924 = vpop.f32.mrb[0].mxu0
        %v1925 = vadd.f32 %v1540, %v1924
        %v1926 = vpop.f32.mrb[0].mxu0
        %1927 = vmatprep.mubr.f32.mxu0 0.0
        %1928 = vmatmul.mubr.f32.gmra.mrb[0].mxu0 %v1206
        %v1929 = vpop.f32.mrb[0].mxu0
        %v1930 = vadd.f32 %v1545, %v1929
        %v1931 = vpop.f32.mrb[0].mxu0
        %1932 = vmatprep.mubr.f32.mxu0 0.0
        %1933 = vmatmul.mubr.f32.gmra.mrb[0].mxu0 %v1209
        %v1934 = vpop.f32.mrb[0].mxu0
        %v1935 = vadd.f32 %v1550, %v1934
        %v1936 = vpop.f32.mrb[0].mxu0
        %1937 = vmatprep.mubr.f32.mxu0 0.0
        %1938 = vmatmul.mubr.f32.gmra.mrb[0].mxu0 %v1212
        %v1939 = vpop.f32.mrb[0].mxu0
        %v1940 = vadd.f32 %v1555, %v1939
        %v1941 = vpop.f32.mrb[0].mxu0
        %1942 = vmatprep.mubr.f32.mxu0 0.0
        %1943 = vmatmul.mubr.f32.gmra.mrb[0].mxu0 %v1215
        %v1944 = vpop.f32.mrb[0].mxu0
        %v1945 = vadd.f32 %v1560, %v1944
        %v1946 = vpop.f32.mrb[0].mxu0
        %1947 = vmatprep.mubr.f32.mxu0 0.0
        %1948 = vmatmul.mubr.f32.gmra.mrb[0].mxu0 %v1218
        %v1949 = vpop.f32.mrb[0].mxu0
        %v1950 = vadd.f32 %v1565, %v1949
        %v1951 = vpop.f32.mrb[0].mxu0
        %1952 = vmatprep.mubr.f32.mxu0 0.0
        %1953 = vmatmul.mubr.f32.gmra.mrb[0].mxu0 %v1221
        %v1954 = vpop.f32.mrb[0].mxu0
        %v1955 = vadd.f32 %v1570, %v1954
        %v1956 = vpop.f32.mrb[0].mxu0
        %1957 = vmatprep.mubr.f32.mxu0 0.0
        %1958 = vmatmul.mubr.f32.gmra.mrb[0].mxu0 %v1224
        %v1959 = vpop.f32.mrb[0].mxu0
        %v1960 = vadd.f32 %v1575, %v1959
        %v1961 = vpop.f32.mrb[0].mxu0
        %1962 = vmatprep.mubr.f32.mxu0 0.0
        %1963 = vmatmul.mubr.f32.gmra.mrb[0].mxu0 %v1227
        %v1964 = vpop.f32.mrb[0].mxu0
        %v1965 = vadd.f32 %v1580, %v1964
        %v1966 = vpop.f32.mrb[0].mxu0
        %1967 = vmatprep.mubr.f32.mxu0 0.0
        %1968 = vmatmul.mubr.f32.gmra.mrb[0].mxu0 %v1230
        %v1969 = vpop.f32.mrb[0].mxu0
        %v1970 = vadd.f32 %v1585, %v1969
        %v1971 = vpop.f32.mrb[0].mxu0
        %1972 = vmatprep.mubr.f32.mxu0 0.0
        %1973 = vmatmul.mubr.f32.gmra.mrb[0].mxu0 %v1233
        %v1974 = vpop.f32.mrb[0].mxu0
        %v1975 = vadd.f32 %v1590, %v1974
        %v1976 = vpop.f32.mrb[0].mxu0
        %1977 = vmatprep.mubr.f32.mxu0 0.0
        %1978 = vmatmul.mubr.f32.gmra.mrb[0].mxu0 %v1236
        %v1979 = vpop.f32.mrb[0].mxu0
        %v1980 = vadd.f32 %v1595, %v1979
        %v1981 = vpop.f32.mrb[0].mxu0
        %1982 = vmatprep.mubr.f32.mxu0 0.0
        %1983 = vmatmul.mubr.f32.gmra.mrb[0].mxu0 %v1239
        %v1984 = vpop.f32.mrb[0].mxu0
        %v1985 = vadd.f32 %v1600, %v1984
        %v1986 = vpop.f32.mrb[0].mxu0
        %1987 = vmatprep.mubr.f32.mxu0 0.0
        %1988 = vmatmul.mubr.f32.gmra.mrb[0].mxu0 %v1242
        %v1989 = vpop.f32.mrb[0].mxu0
        %v1990 = vadd.f32 %v1605, %v1989
        %v1991 = vpop.f32.mrb[0].mxu0
        %1992 = vmatprep.mubr.f32.mxu0 0.0
        %1993 = vmatmul.mubr.f32.gmra.mrb[0].mxu0 %v1245
        %v1994 = vpop.f32.mrb[0].mxu0
        %v1995 = vadd.f32 %v1610, %v1994
        %v1996 = vpop.f32.mrb[0].mxu0
        %1997 = vmatprep.mubr.f32.mxu0 0.0
        %1998 = vmatmul.mubr.f32.gmra.mrb[0].mxu0 %v1248
        %v1999 = vpop.f32.mrb[0].mxu0
        %v2000 = vadd.f32 %v1615, %v1999
        %v2001 = vpop.f32.mrb[0].mxu0
        %2002 = vmatprep.mubr.f32.mxu0 0.0
        %2003 = vmatmul.mubr.f32.gmra.mrb[0].mxu0 %v1251
        %v2004 = vpop.f32.mrb[0].mxu0
        %v2005 = vadd.f32 %v1620, %v2004
        %v2006 = vpop.f32.mrb[0].mxu0
        %2007 = vmatprep.mubr.f32.mxu0 0.0
        %2008 = vmatmul.mubr.f32.gmra.mrb[0].mxu0 %v1254
        %v2009 = vpop.f32.mrb[0].mxu0
        %v2010 = vadd.f32 %v1625, %v2009
        %v2011 = vpop.f32.mrb[0].mxu0
        %2012 = vmatprep.mubr.f32.mxu0 0.0
        %2013 = vmatmul.mubr.f32.gmra.mrb[0].mxu0 %v1257
        %v2014 = vpop.f32.mrb[0].mxu0
        %v2015 = vadd.f32 %v1630, %v2014
        %v2016 = vpop.f32.mrb[0].mxu0
        %2017 = vmatprep.mubr.f32.mxu0 0.0
        %2018 = vmatmul.mubr.f32.gmra.mrb[0].mxu0 %v1260
        %v2019 = vpop.f32.mrb[0].mxu0
        %v2020 = vadd.f32 %v1635, %v2019
        %v2021 = vpop.f32.mrb[0].mxu0
        %2022 = vmatprep.mubr.f32.mxu0 0.0
        %2023 = vmatmul.mubr.f32.gmra.mrb[0].mxu0 %v1263
        %v2024 = vpop.f32.mrb[0].mxu0
        %v2025 = vadd.f32 %v1640, %v2024
        %v2026 = vpop.f32.mrb[0].mxu0
        %2027 = vmatprep.mubr.f32.mxu0 0.0
        %2028 = vmatmul.mubr.f32.gmra.mrb[0].mxu0 %v1266
        %v2029 = vpop.f32.mrb[0].mxu0
        %v2030 = vadd.f32 %v1645, %v2029
        %v2031 = vpop.f32.mrb[0].mxu0
        %2032 = vmatprep.mubr.f32.mxu0 0.0
        %2033 = vmatmul.mubr.f32.gmra.mrb[0].mxu0 %v1269
        %v2034 = vpop.f32.mrb[0].mxu0
        %v2035 = vadd.f32 %v1650, %v2034
        %v2036 = vpop.f32.mrb[0].mxu0
        %2037 = vmatprep.mubr.f32.mxu0 0.0
        %2038 = vmatmul.mubr.f32.gmra.mrb[0].mxu0 %v1272
        %v2039 = vpop.f32.mrb[0].mxu0
        %v2040 = vadd.f32 %v1655, %v2039
        %v2041 = vpop.f32.mrb[0].mxu0
        %2042 = vmatprep.mubr.f32.mxu0 0.0
        %2043 = vmatmul.mubr.f32.gmra.mrb[0].mxu0 %v1275
        %v2044 = vpop.f32.mrb[0].mxu0
        %v2045 = vadd.f32 %v1660, %v2044
        %v2046 = vpop.f32.mrb[0].mxu0
        %2047 = vmatprep.mubr.f32.mxu0 0.0
        %2048 = vmatmul.mubr.f32.gmra.mrb[0].mxu0 %v1278
        %v2049 = vpop.f32.mrb[0].mxu0
        %v2050 = vadd.f32 %v1665, %v2049
        %v2051 = vpop.f32.mrb[0].mxu0
        %2052 = vmatprep.mubr.f32.mxu0 0.0
        %2053 = vmatmul.mubr.f32.gmra.mrb[0].mxu0 %v1281
        %v2054 = vpop.f32.mrb[0].mxu0
        %v2055 = vadd.f32 %v1670, %v2054
        %v2056 = vpop.f32.mrb[0].mxu0
        %2057 = vmatprep.mubr.f32.mxu0 0.0
        %2058 = vmatmul.mubr.f32.gmra.mrb[0].mxu0 %v1284
        %v2059 = vpop.f32.mrb[0].mxu0
        %v2060 = vadd.f32 %v1675, %v2059
        %v2061 = vpop.f32.mrb[0].mxu0
        %2062 = vmatprep.mubr.f32.mxu0 0.0
        %2063 = vmatmul.mubr.f32.gmra.mrb[0].mxu0 %v1287
        %v2064 = vpop.f32.mrb[0].mxu0
        %v2065 = vadd.f32 %v1680, %v2064
        %v2066 = vpop.f32.mrb[0].mxu0
        %2067 = vmatprep.mubr.f32.mxu0 0.0
        %2068 = vmatmul.mubr.f32.gmra.mrb[0].mxu0 %v1290
        %v2069 = vpop.f32.mrb[0].mxu0
        %v2070 = vadd.f32 %v1685, %v2069
        %v2071 = vpop.f32.mrb[0].mxu0
        %2072 = vmatprep.mubr.f32.mxu0 0.0
        %2073 = vmatmul.mubr.f32.gmra.mrb[0].mxu0 %v1293
        %v2074 = vpop.f32.mrb[0].mxu0
        %v2075 = vadd.f32 %v1690, %v2074
        %v2076 = vpop.f32.mrb[0].mxu0
        %2077 = vmatprep.mubr.f32.mxu0 0.0
        %2078 = vmatmul.mubr.f32.gmra.mrb[0].mxu0 %v1296
        %v2079 = vpop.f32.mrb[0].mxu0
        %v2080 = vadd.f32 %v1695, %v2079
        %v2081 = vpop.f32.mrb[0].mxu0
        %2082 = vmatprep.mubr.f32.mxu0 0.0
        %2083 = vmatmul.mubr.f32.gmra.mrb[0].mxu0 %v1299
        %v2084 = vpop.f32.mrb[0].mxu0
        %v2085 = vadd.f32 %v1700, %v2084
        %v2086 = vpop.f32.mrb[0].mxu0
        %2087 = vmatprep.mubr.f32.mxu0 0.0
        %2088 = vmatmul.mubr.f32.gmra.mrb[0].mxu0 %v1302
        %v2089 = vpop.f32.mrb[0].mxu0
        %v2090 = vadd.f32 %v1705, %v2089
        %v2091 = vpop.f32.mrb[0].mxu0
        %2092 = vmatprep.mubr.f32.mxu0 0.0
        %2093 = vmatmul.mubr.f32.gmra.mrb[0].mxu0 %v1305
        %v2094 = vpop.f32.mrb[0].mxu0
        %v2095 = vadd.f32 %v1710, %v2094
        %v2096 = vpop.f32.mrb[0].mxu0
        %2097 = vmatprep.mubr.f32.mxu0 0.0
        %2098 = vmatmul.mubr.f32.gmra.mrb[0].mxu0 %v1308
        %v2099 = vpop.f32.mrb[0].mxu0
        %v2100 = vadd.f32 %v1715, %v2099
        %v2101 = vpop.f32.mrb[0].mxu0
        %2102 = vmatprep.mubr.f32.mxu0 0.0
        %2103 = vmatmul.mubr.f32.gmra.mrb[0].mxu0 %v1311
        %v2104 = vpop.f32.mrb[0].mxu0
        %v2105 = vadd.f32 %v1720, %v2104
        %v2106 = vpop.f32.mrb[0].mxu0
        %2107 = vmatprep.mubr.f32.mxu0 0.0
        %2108 = vmatmul.mubr.f32.gmra.mrb[0].mxu0 %v1314
        %v2109 = vpop.f32.mrb[0].mxu0
        %v2110 = vadd.f32 %v1725, %v2109
        %v2111 = vpop.f32.mrb[0].mxu0
        %2112 = vmatprep.mubr.f32.mxu0 0.0
        %2113 = vmatmul.mubr.f32.gmra.mrb[0].mxu0 %v1317
        %v2114 = vpop.f32.mrb[0].mxu0
        %v2115 = vadd.f32 %v1730, %v2114
        %v2116 = vpop.f32.mrb[0].mxu0
        %2117 = vmatprep.mubr.f32.mxu0 0.0
        %2118 = vmatmul.mubr.f32.gmra.mrb[0].mxu0 %v1320
        %v2119 = vpop.f32.mrb[0].mxu0
        %v2120 = vadd.f32 %v1735, %v2119
        %v2121 = vpop.f32.mrb[0].mxu0
        %2122 = vmatprep.mubr.f32.mxu0 0.0
        %2123 = vmatmul.mubr.f32.gmra.mrb[0].mxu0 %v1323
        %v2124 = vpop.f32.mrb[0].mxu0
        %v2125 = vadd.f32 %v1740, %v2124
        %v2126 = vpop.f32.mrb[0].mxu0
        %2127 = vmatprep.mubr.f32.mxu0 0.0
        %2128 = vmatmul.mubr.f32.gmra.mrb[0].mxu0 %v1326
        %v2129 = vpop.f32.mrb[0].mxu0
        %v2130 = vadd.f32 %v1745, %v2129
        %v2131 = vpop.f32.mrb[0].mxu0
        %2132 = vmatprep.mubr.f32.mxu0 0.0
        %2133 = vmatmul.mubr.f32.gmra.mrb[0].mxu0 %v1329
        %v2134 = vpop.f32.mrb[0].mxu0
        %v2135 = vadd.f32 %v1750, %v2134
        %v2136 = vpop.f32.mrb[0].mxu0
        %2137 = vmatprep.mubr.f32.mxu0 0.0
        %2138 = vmatmul.mubr.f32.gmra.mrb[0].mxu0 %v1332
        %v2139 = vpop.f32.mrb[0].mxu0
        %v2140 = vadd.f32 %v1755, %v2139
        %v2141 = vpop.f32.mrb[0].mxu0
        %2142 = vmatprep.mubr.f32.mxu0 0.0
        %2143 = vmatmul.mubr.f32.gmra.mrb[0].mxu0 %v1335
        %v2144 = vpop.f32.mrb[0].mxu0
        %v2145 = vadd.f32 %v1760, %v2144
        %v2146 = vpop.f32.mrb[0].mxu0
        %2147 = vmatprep.mubr.f32.mxu0 0.0
        %2148 = vmatmul.mubr.f32.gmra.mrb[0].mxu0 %v1338
        %v2149 = vpop.f32.mrb[0].mxu0
        %v2150 = vadd.f32 %v1765, %v2149
        %v2151 = vpop.f32.mrb[0].mxu0
        %2152 = vmatprep.mubr.f32.mxu0 0.0
        %2153 = vmatmul.mubr.f32.gmra.mrb[0].mxu0 %v1341
        %v2154 = vpop.f32.mrb[0].mxu0
        %v2155 = vadd.f32 %v1770, %v2154
        %v2156 = vpop.f32.mrb[0].mxu0
        %2157 = vmatprep.mubr.f32.mxu0 0.0
        %2158 = vmatmul.mubr.f32.gmra.mrb[0].mxu0 %v1344
        %v2159 = vpop.f32.mrb[0].mxu0
        %v2160 = vadd.f32 %v1775, %v2159
        %v2161 = vpop.f32.mrb[0].mxu0
        %2162 = vdwg.mxu0
        %v2163 = vld [vmem:[%s242] sm:$0xff]
        %v2164 = vld [vmem:[%s242 + $0x8] sm:$0xff]
        %v2165 = vld [vmem:[%s242 + $0x10] sm:$0xff]
        %v2166 = vld [vmem:[%s242 + $0x18] sm:$0xff]
        %v2167 = vld [vmem:[%s242 + $0x20] sm:$0xff]
        %v2168 = vld [vmem:[%s242 + $0x28] sm:$0xff]
        %v2169 = vld [vmem:[%s242 + $0x30] sm:$0xff]
        %v2170 = vld [vmem:[%s242 + $0x38] sm:$0xff]
        %v2171 = vld [vmem:[%s242 + $0x40] sm:$0xff]
        %v2172 = vld [vmem:[%s242 + $0x48] sm:$0xff]
        %v2173 = vld [vmem:[%s242 + $0x50] sm:$0xff]
        %v2174 = vld [vmem:[%s242 + $0x58] sm:$0xff]
        %v2175 = vld [vmem:[%s242 + $0x60] sm:$0xff]
        %v2176 = vld [vmem:[%s242 + $0x68] sm:$0xff]
        %v2177 = vld [vmem:[%s242 + $0x70] sm:$0xff]
        %v2178 = vld [vmem:[%s242 + $0x78] sm:$0xff]
        %v2179 = vld [vmem:[%s242 + $0x80] sm:$0xff]
        %v2180 = vld [vmem:[%s242 + $0x88] sm:$0xff]
        %v2181 = vld [vmem:[%s242 + $0x90] sm:$0xff]
        %v2182 = vld [vmem:[%s242 + $0x98] sm:$0xff]
        %v2183 = vld [vmem:[%s242 + $0xa0] sm:$0xff]
        %v2184 = vld [vmem:[%s242 + $0xa8] sm:$0xff]
        %v2185 = vld [vmem:[%s242 + $0xb0] sm:$0xff]
        %v2186 = vld [vmem:[%s242 + $0xb8] sm:$0xff]
        %v2187 = vld [vmem:[%s242 + $0xc0] sm:$0xff]
        %v2188 = vld [vmem:[%s242 + $0xc8] sm:$0xff]
        %v2189 = vld [vmem:[%s242 + $0xd0] sm:$0xff]
        %v2190 = vld [vmem:[%s242 + $0xd8] sm:$0xff]
        %v2191 = vld [vmem:[%s242 + $0xe0] sm:$0xff]
        %v2192 = vld [vmem:[%s242 + $0xe8] sm:$0xff]
        %v2193 = vld [vmem:[%s242 + $0xf0] sm:$0xff]
        %v2194 = vld [vmem:[%s242 + $0xf8] sm:$0xff]
        %v2195 = vld [vmem:[%s242 + $0x100] sm:$0xff]
        %v2196 = vld [vmem:[%s242 + $0x108] sm:$0xff]
        %v2197 = vld [vmem:[%s242 + $0x110] sm:$0xff]
        %v2198 = vld [vmem:[%s242 + $0x118] sm:$0xff]
        %v2199 = vld [vmem:[%s242 + $0x120] sm:$0xff]
        %v2200 = vld [vmem:[%s242 + $0x128] sm:$0xff]
        %v2201 = vld [vmem:[%s242 + $0x130] sm:$0xff]
        %v2202 = vld [vmem:[%s242 + $0x138] sm:$0xff]
        %v2203 = vld [vmem:[%s242 + $0x140] sm:$0xff]
        %v2204 = vld [vmem:[%s242 + $0x148] sm:$0xff]
        %v2205 = vld [vmem:[%s242 + $0x150] sm:$0xff]
        %v2206 = vld [vmem:[%s242 + $0x158] sm:$0xff]
        %v2207 = vld [vmem:[%s242 + $0x160] sm:$0xff]
        %v2208 = vld [vmem:[%s242 + $0x168] sm:$0xff]
        %v2209 = vld [vmem:[%s242 + $0x170] sm:$0xff]
        %v2210 = vld [vmem:[%s242 + $0x178] sm:$0xff]
        %v2211 = vld [vmem:[%s242 + $0x180] sm:$0xff]
        %v2212 = vld [vmem:[%s242 + $0x188] sm:$0xff]
        %v2213 = vld [vmem:[%s242 + $0x190] sm:$0xff]
        %v2214 = vld [vmem:[%s242 + $0x198] sm:$0xff]
        %v2215 = vld [vmem:[%s242 + $0x1a0] sm:$0xff]
        %v2216 = vld [vmem:[%s242 + $0x1a8] sm:$0xff]
        %v2217 = vld [vmem:[%s242 + $0x1b0] sm:$0xff]
        %v2218 = vld [vmem:[%s242 + $0x1b8] sm:$0xff]
        %v2219 = vld [vmem:[%s242 + $0x1c0] sm:$0xff]
        %v2220 = vld [vmem:[%s242 + $0x1c8] sm:$0xff]
        %v2221 = vld [vmem:[%s242 + $0x1d0] sm:$0xff]
        %v2222 = vld [vmem:[%s242 + $0x1d8] sm:$0xff]
        %v2223 = vld [vmem:[%s242 + $0x1e0] sm:$0xff]
        %v2224 = vld [vmem:[%s242 + $0x1e8] sm:$0xff]
        %v2225 = vld [vmem:[%s242 + $0x1f0] sm:$0xff]
        %v2226 = vld [vmem:[%s242 + $0x1f8] sm:$0xff]
        %v2227 = vadd.f32 %v2163, %v1845
        %v2228 = vadd.f32 %v2164, %v1850
        %v2229 = vadd.f32 %v2165, %v1855
        %v2230 = vadd.f32 %v2166, %v1860
        %v2231 = vadd.f32 %v2167, %v1865
        %v2232 = vadd.f32 %v2168, %v1870
        %v2233 = vadd.f32 %v2169, %v1875
        %v2234 = vadd.f32 %v2170, %v1880
        %v2235 = vadd.f32 %v2171, %v1885
        %v2236 = vadd.f32 %v2172, %v1890
        %v2237 = vadd.f32 %v2173, %v1895
        %v2238 = vadd.f32 %v2174, %v1900
        %v2239 = vadd.f32 %v2175, %v1905
        %v2240 = vadd.f32 %v2176, %v1910
        %v2241 = vadd.f32 %v2177, %v1915
        %v2242 = vadd.f32 %v2178, %v1920
        %v2243 = vadd.f32 %v2179, %v1925
        %v2244 = vadd.f32 %v2180, %v1930
        %v2245 = vadd.f32 %v2181, %v1935
        %v2246 = vadd.f32 %v2182, %v1940
        %v2247 = vadd.f32 %v2183, %v1945
        %v2248 = vadd.f32 %v2184, %v1950
        %v2249 = vadd.f32 %v2185, %v1955
        %v2250 = vadd.f32 %v2186, %v1960
        %v2251 = vadd.f32 %v2187, %v1965
        %v2252 = vadd.f32 %v2188, %v1970
        %v2253 = vadd.f32 %v2189, %v1975
        %v2254 = vadd.f32 %v2190, %v1980
        %v2255 = vadd.f32 %v2191, %v1985
        %v2256 = vadd.f32 %v2192, %v1990
        %v2257 = vadd.f32 %v2193, %v1995
        %v2258 = vadd.f32 %v2194, %v2000
        %v2259 = vadd.f32 %v2195, %v2005
        %v2260 = vadd.f32 %v2196, %v2010
        %v2261 = vadd.f32 %v2197, %v2015
        %v2262 = vadd.f32 %v2198, %v2020
        %v2263 = vadd.f32 %v2199, %v2025
        %v2264 = vadd.f32 %v2200, %v2030
        %v2265 = vadd.f32 %v2201, %v2035
        %v2266 = vadd.f32 %v2202, %v2040
        %v2267 = vadd.f32 %v2203, %v2045
        %v2268 = vadd.f32 %v2204, %v2050
        %v2269 = vadd.f32 %v2205, %v2055
        %v2270 = vadd.f32 %v2206, %v2060
        %v2271 = vadd.f32 %v2207, %v2065
        %v2272 = vadd.f32 %v2208, %v2070
        %v2273 = vadd.f32 %v2209, %v2075
        %v2274 = vadd.f32 %v2210, %v2080
        %v2275 = vadd.f32 %v2211, %v2085
        %v2276 = vadd.f32 %v2212, %v2090
        %v2277 = vadd.f32 %v2213, %v2095
        %v2278 = vadd.f32 %v2214, %v2100
        %v2279 = vadd.f32 %v2215, %v2105
        %v2280 = vadd.f32 %v2216, %v2110
        %v2281 = vadd.f32 %v2217, %v2115
        %v2282 = vadd.f32 %v2218, %v2120
        %v2283 = vadd.f32 %v2219, %v2125
        %v2284 = vadd.f32 %v2220, %v2130
        %v2285 = vadd.f32 %v2221, %v2135
        %v2286 = vadd.f32 %v2222, %v2140
        %v2287 = vadd.f32 %v2223, %v2145
        %v2288 = vadd.f32 %v2224, %v2150
        %v2289 = vadd.f32 %v2225, %v2155
        %v2290 = vadd.f32 %v2226, %v2160
        %2291 = vst [vmem:[%s219] sm:$0xff] %v2227
        %2292 = vst [vmem:[%s219 + $0x8] sm:$0xff] %v2228
        %2293 = vst [vmem:[%s219 + $0x10] sm:$0xff] %v2229
        %2294 = vst [vmem:[%s219 + $0x18] sm:$0xff] %v2230
        %2295 = vst [vmem:[%s219 + $0x20] sm:$0xff] %v2231
        %2296 = vst [vmem:[%s219 + $0x28] sm:$0xff] %v2232
        %2297 = vst [vmem:[%s219 + $0x30] sm:$0xff] %v2233
        %2298 = vst [vmem:[%s219 + $0x38] sm:$0xff] %v2234
        %2299 = vst [vmem:[%s219 + $0x40] sm:$0xff] %v2235
        %2300 = vst [vmem:[%s219 + $0x48] sm:$0xff] %v2236
        %2301 = vst [vmem:[%s219 + $0x50] sm:$0xff] %v2237
        %2302 = vst [vmem:[%s219 + $0x58] sm:$0xff] %v2238
        %2303 = vst [vmem:[%s219 + $0x60] sm:$0xff] %v2239
        %2304 = vst [vmem:[%s219 + $0x68] sm:$0xff] %v2240
        %2305 = vst [vmem:[%s219 + $0x70] sm:$0xff] %v2241
        %2306 = vst [vmem:[%s219 + $0x78] sm:$0xff] %v2242
        %2307 = vst [vmem:[%s219 + $0x80] sm:$0xff] %v2243
        %2308 = vst [vmem:[%s219 + $0x88] sm:$0xff] %v2244
        %2309 = vst [vmem:[%s219 + $0x90] sm:$0xff] %v2245
        %2310 = vst [vmem:[%s219 + $0x98] sm:$0xff] %v2246
        %2311 = vst [vmem:[%s219 + $0xa0] sm:$0xff] %v2247
        %2312 = vst [vmem:[%s219 + $0xa8] sm:$0xff] %v2248
        %2313 = vst [vmem:[%s219 + $0xb0] sm:$0xff] %v2249
        %2314 = vst [vmem:[%s219 + $0xb8] sm:$0xff] %v2250
        %2315 = vst [vmem:[%s219 + $0xc0] sm:$0xff] %v2251
        %2316 = vst [vmem:[%s219 + $0xc8] sm:$0xff] %v2252
        %2317 = vst [vmem:[%s219 + $0xd0] sm:$0xff] %v2253
        %2318 = vst [vmem:[%s219 + $0xd8] sm:$0xff] %v2254
        %2319 = vst [vmem:[%s219 + $0xe0] sm:$0xff] %v2255
        %2320 = vst [vmem:[%s219 + $0xe8] sm:$0xff] %v2256
        %2321 = vst [vmem:[%s219 + $0xf0] sm:$0xff] %v2257
        %2322 = vst [vmem:[%s219 + $0xf8] sm:$0xff] %v2258
        %2323 = vst [vmem:[%s219 + $0x100] sm:$0xff] %v2259
        %2324 = vst [vmem:[%s219 + $0x108] sm:$0xff] %v2260
        %2325 = vst [vmem:[%s219 + $0x110] sm:$0xff] %v2261
        %2326 = vst [vmem:[%s219 + $0x118] sm:$0xff] %v2262
        %2327 = vst [vmem:[%s219 + $0x120] sm:$0xff] %v2263
        %2328 = vst [vmem:[%s219 + $0x128] sm:$0xff] %v2264
        %2329 = vst [vmem:[%s219 + $0x130] sm:$0xff] %v2265
        %2330 = vst [vmem:[%s219 + $0x138] sm:$0xff] %v2266
        %2331 = vst [vmem:[%s219 + $0x140] sm:$0xff] %v2267
        %2332 = vst [vmem:[%s219 + $0x148] sm:$0xff] %v2268
        %2333 = vst [vmem:[%s219 + $0x150] sm:$0xff] %v2269
        %2334 = vst [vmem:[%s219 + $0x158] sm:$0xff] %v2270
        %2335 = vst [vmem:[%s219 + $0x160] sm:$0xff] %v2271
        %2336 = vst [vmem:[%s219 + $0x168] sm:$0xff] %v2272
        %2337 = vst [vmem:[%s219 + $0x170] sm:$0xff] %v2273
        %2338 = vst [vmem:[%s219 + $0x178] sm:$0xff] %v2274
        %2339 = vst [vmem:[%s219 + $0x180] sm:$0xff] %v2275
        %2340 = vst [vmem:[%s219 + $0x188] sm:$0xff] %v2276
        %2341 = vst [vmem:[%s219 + $0x190] sm:$0xff] %v2277
        %2342 = vst [vmem:[%s219 + $0x198] sm:$0xff] %v2278
        %2343 = vst [vmem:[%s219 + $0x1a0] sm:$0xff] %v2279
        %2344 = vst [vmem:[%s219 + $0x1a8] sm:$0xff] %v2280
        %2345 = vst [vmem:[%s219 + $0x1b0] sm:$0xff] %v2281
        %2346 = vst [vmem:[%s219 + $0x1b8] sm:$0xff] %v2282
        %2347 = vst [vmem:[%s219 + $0x1c0] sm:$0xff] %v2283
        %2348 = vst [vmem:[%s219 + $0x1c8] sm:$0xff] %v2284
        %2349 = vst [vmem:[%s219 + $0x1d0] sm:$0xff] %v2285
        %2350 = vst [vmem:[%s219 + $0x1d8] sm:$0xff] %v2286
        %2351 = vst [vmem:[%s219 + $0x1e0] sm:$0xff] %v2287
        %2352 = vst [vmem:[%s219 + $0x1e8] sm:$0xff] %v2288
        %2353 = vst [vmem:[%s219 + $0x1f0] sm:$0xff] %v2289
        %2354 = vst [vmem:[%s219 + $0x1f8] sm:$0xff] %v2290
        %s2355 = sand.u32 %s99, 1
        %s2356 = scalar_lea.sflag [#allocation4], %s2355
        %s2357 = sand.u32 %s99, 1
        %s2358 = smul.addr %s2357, 512
        %s2359 = scalar_lea.vmem [#allocation5], %s2358
        // Predicated region
        $region37: #{patch_expanding3d_gather_add.1} parent=31 // pred_check
          %p2360 = pneg %p109
        $region38: #{patch_expanding3d_gather_add.1} parent=31 // pred_check_branch
          %2362 = sbr.rel (%p2360) target = $region40
        $region39: #{patch_expanding3d_gather_add.1} parent=31 // pred_region
          %s2363 = smul.u32 64, %s18
          %s2364 = ssub.s32 125, %s2363
          %p2365 = scmp.lt.s32.totalorder %s2364, 64
          %s2366 = scalar_select %p2365, %s2364, 64
          %s2367 = smul.u32 128, %s2366
          %s2369 = ssub.s32 8192, %s2367
          %2370 = vsyncadd %s2356, %s2369
          %p2371 = scmp.ne.s32.totalorder 0, %s2367
          %s2372 = smul.addr %s2363, 128
          %s2373 = scalar_lea.hbm %s3, %s2372
          %s2374 = smul.u32 8, %s2366
          %s2375 = sshll.u32 %s2359, 4
          %s2376 = int_to_ptr.vmem [resolvable:$true] %s2375
          %s2377 = sshll.u32 %s2374, 4
          %2381 = dma.vmem_to_hbm [thread:$0]  (%p2371), %s2376, %s2377, %s2373, %s2356, 128, 128, 8
        $region40: #{patch_expanding3d_gather_add.1} parent=31 // pred_fallthru
          _
      $region32: #{patch_expanding3d_gather_add.1} parent=5 // pred_fallthru
        _
      %p2382 = scmp.le.s32.totalorder 2, %s13
      // Predicated region
      $region41: #{patch_expanding3d_gather_add.1} parent=5 // pred_check
        %p2383 = pneg %p2382
      $region42: #{patch_expanding3d_gather_add.1} parent=5 // pred_check_branch
        %2385 = sbr.rel (%p2383) target = $region44
      $region43: #{patch_expanding3d_gather_add.1} parent=5 // pred_region
        %s2386 = ssub.s32 %s13, 2
        // Predicated region
        $region45: #{patch_expanding3d_gather_add.1} parent=43 // pred_check
          %p2387 = pneg %p115
        $region46: #{patch_expanding3d_gather_add.1} parent=43 // pred_check_branch
          %2389 = sbr.rel (%p2387) target = $region48
        $region47: #{patch_expanding3d_gather_add.1} parent=43 // pred_region
          %s2390 = sand.u32 %s100, 1
          %s2391 = scalar_lea.sflag [#allocation4], %s2390
          %s2392 = sand.u32 %s100, 1
          %s2393 = smul.addr %s2392, 512
          %s2394 = scalar_lea.vmem [#allocation5], %s2393
          %2395 = dma.done %s2391, 8192
        $region48: #{patch_expanding3d_gather_add.1} parent=43 // pred_fallthru
          _
      $region44: #{patch_expanding3d_gather_add.1} parent=5 // pred_fallthru
        _
    $region6: #{patch_expanding3d_gather_add.1} parent=1 // loop_footer
      %s17 = sadd.s32 1, %s13
    $region7: #{patch_expanding3d_gather_add.1} parent=1 // loop_footer_branch
      %12 = sbr.rel target = $region3
    $region8: #{patch_expanding3d_gather_add.1} parent=1 // loop_exit
      _
    %2396 = vsyncpa [#allocation3], 1
    %s2397 = scalar_lea.sflag [#allocation3], 1
    %2398 = vsyncpa %s2397, 1
    %2399 = vsyncpa [#allocation4], 1
    %s2400 = scalar_lea.sflag [#allocation4], 1
    %2401 = vsyncpa %s2400, 1

</llo_original>
